<compile_context>
chip_gen: v7x
topology: tpu7x:2x2x1
jax: 0.10.0
libtpu: 0.0.40
codegen_flags: <defaults>
</compile_context>

<pallas_src>
import math
import jax
import jax.numpy as jnp
from jax.experimental import pallas as pl
from jax.experimental.pallas import tpu as pltpu


def _make_mlp_kernel(n_mlp):
    """Build a fused kernel: fc + GELU followed by `n_mlp` (Linear + GELU) blocks."""

    def kernel(x_ref, *refs):
        # refs = (fc_w, fc_b, w_0, b_0, ..., w_{n_mlp-1}, b_{n_mlp-1}, o_ref)
        o_ref = refs[-1]

        # In-kernel downcast of the f32 x tile (cheap VPU work, hidden under DMA).
        x = x_ref[...].astype(jnp.bfloat16)

        # ---- fc: Linear(word_dim -> item_dim) on the MXU, f32 accumulation ----
        h = jnp.dot(x, refs[0][...],
                    preferred_element_type=jnp.float32) + refs[1][...]
        # ---- GELU (tanh approximation -> EUP slot) ----
        h = jax.nn.gelu(h, approximate=True)

        # ---- MLP stack: Dropout (identity in eval) -> Linear -> GELU ----
        for l in range(n_mlp):
            w_ref = refs[2 + 2 * l]
            b_ref = refs[3 + 2 * l]
            h = jnp.dot(h.astype(w_ref.dtype), w_ref[...],
                        preferred_element_type=jnp.float32) + b_ref[...]
            h = jax.nn.gelu(h, approximate=True)

        o_ref[...] = h.astype(o_ref.dtype)

    return kernel


def mlp_layers_pallas(x, params, *, tile_n=512, out_dtype=jnp.bfloat16):
    """Fused MLP_Layers forward.

    x: (N, word_embedding_dim) float32 (cast to bf16 inside the kernel).
    params: {"fc_w": (word_dim, item_dim) bf16, "fc_b": (1, item_dim) f32,
             "ws": [(l_i, l_{i+1}) bf16, ...], "bs": [(1, l_{i+1}) f32, ...]}
    Returns (N, layers[-1]) in `out_dtype` (pass jnp.float32 for exact module
    output dtype; bf16 halves the dominant output HBM stream).
    """
    N, d_in = x.shape
    fc_w, fc_b = params["fc_w"], params["fc_b"]
    ws, bs = params["ws"], params["bs"]
    d_out = ws[-1].shape[1] if ws else fc_w.shape[1]

    # Batch tile: large tiles amortize the ~0.35us/step grid overhead. No
    # padding / slicing — a ragged last block is masked by Pallas itself.
    tile_n = min(tile_n, N)
    if tile_n < N:
        tile_n = max(8, (tile_n // 8) * 8)      # keep (8,128)-friendly sublane count
    grid = (pl.cdiv(N, tile_n),)

    weight_args = [fc_w, fc_b]
    for w, b in zip(ws, bs):
        weight_args += [w, b]

    def full_spec(a):
        # whole-array block, resident in VMEM for every grid step
        return pl.BlockSpec(a.shape, lambda i: (0,) * a.ndim)

    in_specs = [pl.BlockSpec((tile_n, d_in), lambda i: (i, 0))]   # x: batch-tiled
    in_specs += [full_spec(a) for a in weight_args]
    out_spec = pl.BlockSpec((tile_n, d_out), lambda i: (i, 0))    # lane-dense output

    # Advisory cost hint for XLA's scheduler.
    widths = [fc_w.shape[1]] + [w.shape[1] for w in ws]
    dims = [d_in] + widths
    flops = 2 * N * sum(a * b for a, b in zip(dims[:-1], dims[1:]))
    transcendentals = N * sum(widths)                     # one tanh per GELU output
    bytes_accessed = (x.size * x.dtype.itemsize
                      + sum(a.size * a.dtype.itemsize for a in weight_args)
                      + N * d_out * jnp.dtype(out_dtype).itemsize)

    out = pl.pallas_call(
        _make_mlp_kernel(len(ws)),
        out_shape=jax.ShapeDtypeStruct((N, d_out), out_dtype),
        grid=grid,
        in_specs=in_specs,
        out_specs=out_spec,
        compiler_params=pltpu.CompilerParams(
            dimension_semantics=("parallel",)),   # batch tiles are independent
        cost_estimate=pl.CostEstimate(flops=flops,
                                      transcendentals=transcendentals,
                                      bytes_accessed=bytes_accessed),
    )(x, *weight_args)

    return out


def init_params(key, word_dim, item_dim, layers):
    """Parameters matching _init_weights (xavier_normal weights, zero bias).

    Weights are produced directly in bf16 (pre-transposed to (in, out)) so the
    wrapper does no casting; biases stay f32 and are added to the f32 MXU
    accumulator inside the kernel.
    """
    n_mlp = max(len(layers) - 1, 1)
    ks = jax.random.split(key, 1 + n_mlp)

    def xavier_normal(k, fan_in, fan_out):
        std = math.sqrt(2.0 / (fan_in + fan_out))
        w = jax.random.normal(k, (fan_in, fan_out), jnp.float32) * std
        return w.astype(jnp.bfloat16)

    params = {
        "fc_w": xavier_normal(ks[0], word_dim, item_dim),
        "fc_b": jnp.zeros((1, item_dim), jnp.float32),
        "ws": [],
        "bs": [],
    }
    for i, (d_a, d_b) in enumerate(zip(layers[:-1], layers[1:])):
        params["ws"].append(xavier_normal(ks[1 + i], d_a, d_b))
        params["bs"].append(jnp.zeros((1, d_b), jnp.float32))
    return params


def mlp_layers_ref(x, p):
    """Pure-JAX reference using the same bf16-matmul / tanh-GELU math as the kernel."""
    h = jnp.dot(x.astype(jnp.bfloat16), p["fc_w"],
                preferred_element_type=jnp.float32) + p["fc_b"]
    h = jax.nn.gelu(h, approximate=True)
    for w, b in zip(p["ws"], p["bs"]):
        h = jnp.dot(h.astype(jnp.bfloat16), w,
                    preferred_element_type=jnp.float32) + b
        h = jax.nn.gelu(h, approximate=True)
    return h


if __name__ == "__main__":
    key = jax.random.PRNGKey(0)
    k_x, k_p = jax.random.split(key)

    # Small, lane-dense shapes consistent with the module's forward:
    #   sample_items: (N, word_embedding_dim); layers[0] == item_embedding_dim.
    N = 256
    word_embedding_dim = 128
    item_embedding_dim = 128
    layers = [128, 256, 128]
    assert layers[0] == item_embedding_dim

    x = jax.random.normal(k_x, (N, word_embedding_dim), jnp.float32)
    params = init_params(k_p, word_embedding_dim, item_embedding_dim, layers)

    # tile_n=128 -> grid=(2,): two batch tiles, bf16 output store.
    out = mlp_layers_pallas(x, params, tile_n=128, out_dtype=jnp.bfloat16)
    out = jax.block_until_ready(out)

    ref = mlp_layers_ref(x, params)
    assert out.shape == (N, layers[-1])
    assert jnp.allclose(out.astype(jnp.float32), ref, rtol=2e-2, atol=2e-2), \
        "mismatch vs reference"

    print("KERNEL_OK")
</pallas_src>

<mosaic_0001>
module attributes {stable_mosaic.version = 11 : i64} {
  func.func @kernel(%arg0: i32, %arg1: memref<128x128xf32, #tpu.memory_space<vmem>>, %arg2: memref<128x128xbf16, #tpu.memory_space<vmem>>, %arg3: memref<1x128xf32, #tpu.memory_space<vmem>>, %arg4: memref<128x256xbf16, #tpu.memory_space<vmem>>, %arg5: memref<1x256xf32, #tpu.memory_space<vmem>>, %arg6: memref<256x128xbf16, #tpu.memory_space<vmem>>, %arg7: memref<1x128xf32, #tpu.memory_space<vmem>>, %arg8: memref<128x128xbf16, #tpu.memory_space<vmem>>) attributes {dimension_semantics = [#tpu.dimension_semantics<parallel>], iteration_bounds = array<i64: 2>, scalar_prefetch = 0 : i64, scratch_operands = 0 : i64, tpu.core_type = #tpu.core_type<tc>, window_params = [{transform_indices = @transform_0, window_bounds = array<i64: 128, 128>}, {pipeline_mode = #tpu.pipeline_mode<synchronous>, transform_indices = @transform_1, window_bounds = array<i64: 128, 128>}, {pipeline_mode = #tpu.pipeline_mode<synchronous>, transform_indices = @transform_2, window_bounds = array<i64: 1, 128>}, {pipeline_mode = #tpu.pipeline_mode<synchronous>, transform_indices = @transform_3, window_bounds = array<i64: 128, 256>}, {pipeline_mode = #tpu.pipeline_mode<synchronous>, transform_indices = @transform_4, window_bounds = array<i64: 1, 256>}, {pipeline_mode = #tpu.pipeline_mode<synchronous>, transform_indices = @transform_5, window_bounds = array<i64: 256, 128>}, {pipeline_mode = #tpu.pipeline_mode<synchronous>, transform_indices = @transform_6, window_bounds = array<i64: 1, 128>}, {transform_indices = @transform_7, window_bounds = array<i64: 128, 128>}]} {
    %c0 = arith.constant 0 : index
    %c0_0 = arith.constant 0 : index
    %0 = vector.load %arg1[%c0, %c0_0] : memref<128x128xf32, #tpu.memory_space<vmem>>, vector<128x128xf32>
    %1 = arith.truncf %0 : vector<128x128xf32> to vector<128x128xbf16>
    %c0_1 = arith.constant 0 : index
    %c0_2 = arith.constant 0 : index
    %2 = vector.load %arg2[%c0_1, %c0_2] : memref<128x128xbf16, #tpu.memory_space<vmem>>, vector<128x128xbf16>
    %cst = arith.constant dense<0.000000e+00> : vector<128x128xf32>
    %3 = tpu.matmul %1, %2, %cst {dimension_numbers = #tpu.dot_dimension_numbers<[1], [0], [0], [1], [0, 0, 1, 1], [], []>} : vector<128x128xbf16>, vector<128x128xbf16>, vector<128x128xf32> -> vector<128x128xf32>
    %c0_3 = arith.constant 0 : index
    %c0_4 = arith.constant 0 : index
    %4 = vector.load %arg3[%c0_3, %c0_4] : memref<1x128xf32, #tpu.memory_space<vmem>>, vector<1x128xf32>
    %5 = vector.broadcast %4 : vector<1x128xf32> to vector<128x128xf32>
    %6 = arith.addf %3, %5 : vector<128x128xf32>
    %7 = arith.mulf %6, %6 : vector<128x128xf32>
    %8 = arith.mulf %6, %7 : vector<128x128xf32>
    %cst_5 = arith.constant 4.471500e-02 : f32
    %9 = vector.broadcast %cst_5 : f32 to vector<128x128xf32>
    %10 = arith.mulf %9, %8 : vector<128x128xf32>
    %11 = arith.addf %6, %10 : vector<128x128xf32>
    %cst_6 = arith.constant 0.797884583 : f32
    %12 = vector.broadcast %cst_6 : f32 to vector<128x128xf32>
    %13 = arith.mulf %12, %11 : vector<128x128xf32>
    %14 = math.tanh %13 : vector<128x128xf32>
    %cst_7 = arith.constant 1.000000e+00 : f32
    %15 = vector.broadcast %cst_7 : f32 to vector<128x128xf32>
    %16 = arith.addf %15, %14 : vector<128x128xf32>
    %cst_8 = arith.constant 5.000000e-01 : f32
    %17 = vector.broadcast %cst_8 : f32 to vector<128x128xf32>
    %18 = arith.mulf %17, %16 : vector<128x128xf32>
    %19 = arith.mulf %6, %18 : vector<128x128xf32>
    %20 = arith.truncf %19 : vector<128x128xf32> to vector<128x128xbf16>
    %c0_9 = arith.constant 0 : index
    %c0_10 = arith.constant 0 : index
    %21 = vector.load %arg4[%c0_9, %c0_10] : memref<128x256xbf16, #tpu.memory_space<vmem>>, vector<128x256xbf16>
    %cst_11 = arith.constant dense<0.000000e+00> : vector<128x256xf32>
    %22 = tpu.matmul %20, %21, %cst_11 {dimension_numbers = #tpu.dot_dimension_numbers<[1], [0], [0], [1], [0, 0, 1, 1], [], []>} : vector<128x128xbf16>, vector<128x256xbf16>, vector<128x256xf32> -> vector<128x256xf32>
    %c0_12 = arith.constant 0 : index
    %c0_13 = arith.constant 0 : index
    %23 = vector.load %arg5[%c0_12, %c0_13] : memref<1x256xf32, #tpu.memory_space<vmem>>, vector<1x256xf32>
    %24 = vector.broadcast %23 : vector<1x256xf32> to vector<128x256xf32>
    %25 = arith.addf %22, %24 : vector<128x256xf32>
    %26 = arith.mulf %25, %25 : vector<128x256xf32>
    %27 = arith.mulf %25, %26 : vector<128x256xf32>
    %cst_14 = arith.constant 4.471500e-02 : f32
    %28 = vector.broadcast %cst_14 : f32 to vector<128x256xf32>
    %29 = arith.mulf %28, %27 : vector<128x256xf32>
    %30 = arith.addf %25, %29 : vector<128x256xf32>
    %cst_15 = arith.constant 0.797884583 : f32
    %31 = vector.broadcast %cst_15 : f32 to vector<128x256xf32>
    %32 = arith.mulf %31, %30 : vector<128x256xf32>
    %33 = math.tanh %32 : vector<128x256xf32>
    %cst_16 = arith.constant 1.000000e+00 : f32
    %34 = vector.broadcast %cst_16 : f32 to vector<128x256xf32>
    %35 = arith.addf %34, %33 : vector<128x256xf32>
    %cst_17 = arith.constant 5.000000e-01 : f32
    %36 = vector.broadcast %cst_17 : f32 to vector<128x256xf32>
    %37 = arith.mulf %36, %35 : vector<128x256xf32>
    %38 = arith.mulf %25, %37 : vector<128x256xf32>
    %39 = arith.truncf %38 : vector<128x256xf32> to vector<128x256xbf16>
    %c0_18 = arith.constant 0 : index
    %c0_19 = arith.constant 0 : index
    %40 = vector.load %arg6[%c0_18, %c0_19] : memref<256x128xbf16, #tpu.memory_space<vmem>>, vector<256x128xbf16>
    %cst_20 = arith.constant dense<0.000000e+00> : vector<128x128xf32>
    %41 = tpu.matmul %39, %40, %cst_20 {dimension_numbers = #tpu.dot_dimension_numbers<[1], [0], [0], [1], [0, 0, 1, 1], [], []>} : vector<128x256xbf16>, vector<256x128xbf16>, vector<128x128xf32> -> vector<128x128xf32>
    %c0_21 = arith.constant 0 : index
    %c0_22 = arith.constant 0 : index
    %42 = vector.load %arg7[%c0_21, %c0_22] : memref<1x128xf32, #tpu.memory_space<vmem>>, vector<1x128xf32>
    %43 = vector.broadcast %42 : vector<1x128xf32> to vector<128x128xf32>
    %44 = arith.addf %41, %43 : vector<128x128xf32>
    %45 = arith.mulf %44, %44 : vector<128x128xf32>
    %46 = arith.mulf %44, %45 : vector<128x128xf32>
    %cst_23 = arith.constant 4.471500e-02 : f32
    %47 = vector.broadcast %cst_23 : f32 to vector<128x128xf32>
    %48 = arith.mulf %47, %46 : vector<128x128xf32>
    %49 = arith.addf %44, %48 : vector<128x128xf32>
    %cst_24 = arith.constant 0.797884583 : f32
    %50 = vector.broadcast %cst_24 : f32 to vector<128x128xf32>
    %51 = arith.mulf %50, %49 : vector<128x128xf32>
    %52 = math.tanh %51 : vector<128x128xf32>
    %cst_25 = arith.constant 1.000000e+00 : f32
    %53 = vector.broadcast %cst_25 : f32 to vector<128x128xf32>
    %54 = arith.addf %53, %52 : vector<128x128xf32>
    %cst_26 = arith.constant 5.000000e-01 : f32
    %55 = vector.broadcast %cst_26 : f32 to vector<128x128xf32>
    %56 = arith.mulf %55, %54 : vector<128x128xf32>
    %57 = arith.mulf %44, %56 : vector<128x128xf32>
    %58 = arith.truncf %57 : vector<128x128xf32> to vector<128x128xbf16>
    %c0_27 = arith.constant 0 : index
    %c0_28 = arith.constant 0 : index
    %59 = vector.load %arg8[%c0_27, %c0_28] : memref<128x128xbf16, #tpu.memory_space<vmem>>, vector<128x128xbf16>
    tpu.vector_store %arg8[%c0_27, %c0_28], %58 {strides = array<i32>} : memref<128x128xbf16, #tpu.memory_space<vmem>>, vector<128x128xbf16>,
    return
  }
  func.func @transform_0(%arg0: i32) -> (i32, i32) {
    %c0_i32 = arith.constant 0 : i32
    %c0_i32_0 = arith.constant 0 : i32
    return %arg0, %c0_i32 : i32, i32
  }
  func.func @transform_1(%arg0: i32) -> (i32, i32) {
    %c0_i32 = arith.constant 0 : i32
    %c0_i32_0 = arith.constant 0 : i32
    %c0_i32_1 = arith.constant 0 : i32
    return %c0_i32, %c0_i32_0 : i32, i32
  }
  func.func @transform_2(%arg0: i32) -> (i32, i32) {
    %c0_i32 = arith.constant 0 : i32
    %c0_i32_0 = arith.constant 0 : i32
    %c0_i32_1 = arith.constant 0 : i32
    return %c0_i32, %c0_i32_0 : i32, i32
  }
  func.func @transform_3(%arg0: i32) -> (i32, i32) {
    %c0_i32 = arith.constant 0 : i32
    %c0_i32_0 = arith.constant 0 : i32
    %c0_i32_1 = arith.constant 0 : i32
    return %c0_i32, %c0_i32_0 : i32, i32
  }
  func.func @transform_4(%arg0: i32) -> (i32, i32) {
    %c0_i32 = arith.constant 0 : i32
    %c0_i32_0 = arith.constant 0 : i32
    %c0_i32_1 = arith.constant 0 : i32
    return %c0_i32, %c0_i32_0 : i32, i32
  }
  func.func @transform_5(%arg0: i32) -> (i32, i32) {
    %c0_i32 = arith.constant 0 : i32
    %c0_i32_0 = arith.constant 0 : i32
    %c0_i32_1 = arith.constant 0 : i32
    return %c0_i32, %c0_i32_0 : i32, i32
  }
  func.func @transform_6(%arg0: i32) -> (i32, i32) {
    %c0_i32 = arith.constant 0 : i32
    %c0_i32_0 = arith.constant 0 : i32
    %c0_i32_1 = arith.constant 0 : i32
    return %c0_i32, %c0_i32_0 : i32, i32
  }
  func.func @transform_7(%arg0: i32) -> (i32, i32) {
    %c0_i32 = arith.constant 0 : i32
    %c0_i32_0 = arith.constant 0 : i32
    return %arg0, %c0_i32 : i32, i32
  }
}

</mosaic_0001>

<llo_original>
// kernel: tpu_custom_call.1
$region0: #{tpu_custom_call.1}
  #allocation0 [shape = 'u32[]', space=smem, size = 0x4, offset = 0x4, fixed_abs, tag = 'smem constant byte address 0x4 - core index']
  #allocation1 [shape = 'u32[144,128]{1,0:T(1,128)}', space=vmem, size = 0x12000, scoped, tag = 'internal scratch']
  %s0 = inlined_call_operand.hbm [shape: f32[256,128], index: 0, kind: input, shape index: {}]
  %s1 = inlined_call_operand.hbm [shape: bf16[128,128], index: 1, kind: input, shape index: {}]
  %s2 = inlined_call_operand.vmem [shape: f32[1,128], index: 2, kind: input, shape index: {}]
  %s3 = inlined_call_operand.hbm [shape: bf16[128,256], index: 3, kind: input, shape index: {}]
  %s4 = inlined_call_operand.vmem [shape: f32[1,256], index: 4, kind: input, shape index: {}]
  %s5 = inlined_call_operand.hbm [shape: bf16[256,128], index: 5, kind: input, shape index: {}]
  %s6 = inlined_call_operand.vmem [shape: f32[1,128], index: 6, kind: input, shape index: {}]
  %s7 = inlined_call_operand.hbm [shape: bf16[256,128], index: 7, kind: output, shape index: {}]
  %s8 = sld [smem:[#allocation0]]
  $region77: #{tpu_custom_call.1} parent=0
    _
  %s10 = ssub.s32 1, %s8
  %s11 = scalar_select 0, %s10, %s8
  $region1: #{tpu_custom_call.1} parent=0
    #allocation2 [shape = 'u8[131072]{0}', space=vmem, size = 0x20000, scoped, tag = 'input window, operand 0']
    #allocation3 [shape = 's32[2]{0}', space=sflag, size = 0x8, scoped, tag = 'scoped memory for tpu_custom_call.1']
    #allocation4 [shape = 's32[2]{0}', space=sflag, size = 0x8, scoped, tag = 'scoped memory for tpu_custom_call.1']
    #allocation5 [shape = 'u8[32768]{0}', space=vmem, size = 0x8000, scoped, tag = 'input window, operand 1, single buffered']
    #allocation6 [shape = 's32[1]{0}', space=sflag, size = 0x4, scoped, tag = 'scoped memory for tpu_custom_call.1']
    #allocation7 [shape = 'u8[65536]{0}', space=vmem, size = 0x10000, scoped, tag = 'input window, operand 3, single buffered']
    #allocation8 [shape = 'u8[65536]{0}', space=vmem, size = 0x10000, scoped, tag = 'input window, operand 5, single buffered']
    #allocation9 [shape = 's32[1]{0}', space=sflag, size = 0x4, scoped, tag = 'scoped memory for tpu_custom_call.1']
    #allocation10 [shape = 'u8[65536]{0}', space=vmem, size = 0x10000, scoped, tag = 'output window, operand 0']
    %12 = vsyncpa [#allocation3], 0
    %s13 = scalar_lea.sflag [#allocation3], 1
    %14 = vsyncpa %s13, 0
    %15 = vsyncpa [#allocation6], 0
    %16 = vsyncpa [#allocation9], 0
    %17 = vsyncpa [#allocation4], 0
    %s18 = scalar_lea.sflag [#allocation4], 1
    %19 = vsyncpa %s18, 0
    loop: start=0, step=1, limit=4
    $region2: #{tpu_custom_call.1} parent=1 // loop_pre_header
      _
    $region3: #{tpu_custom_call.1} parent=1 // loop_header
      %s21 = sphi 0, %s25
      %p22 = scmp.ge.s32.totalorder %s21, 4
      %s31 = sphi 0, %s33
      %s34 = sphi 0, %s31
      %s35 = sphi 0, %s34
      %s51 = sphi 0, %s35
      %s55 = sphi 0, %s55
      %s57 = sphi 0, %s55
      %s58 = sphi 0, %s57
      %s72 = sphi 0, %s58
      %s76 = sphi 0, %s76
      %s78 = sphi 0, %s76
      %s79 = sphi 0, %s78
      %s93 = sphi 0, %s79
      %s97 = sphi 0, %s97
      %s99 = sphi 0, %s97
      %s100 = sphi 0, %s99
      %s114 = sphi 0, %s100
      %s118 = sphi 0, %s118
      %s120 = sphi 0, %s118
      %s121 = sphi 0, %s120
      %s135 = sphi 0, %s121
      %s139 = sphi 0, %s139
      %s141 = sphi 0, %s139
      %s142 = sphi 0, %s141
      %s156 = sphi 0, %s142
      %s160 = sphi 0, %s160
      %s162 = sphi 0, %s160
      %s163 = sphi 0, %s162
      %s177 = sphi 0, %s163
      %s183 = sphi 0, %s185
      %s186 = sphi 0, %s183
      %s187 = sphi 0, %s186
      %s203 = sphi 0, %s187
    $region4: #{tpu_custom_call.1} parent=1 // loop_header_branch
      %24 = sbr.rel (%p22) target = $region8
    $region5: #{tpu_custom_call.1} parent=1 // loop_body
      %s26 = ssub.s32 %s21, 1
      %s27 = ssub.s32 %s21, 2
      %s28 = sadd.s32 %s21, 1
      %s29 = ssub.s32 %s21, %s28
      %p30 = scmp.eq.s32.totalorder %s29, 0
      %s32 = sadd.s32 %s31, 1
      %s33 = scalar_select %p30, %s31, %s32
      %p36 = pneg %p30
      %p37 = scmp.eq.s32.totalorder %s21, 1
      %p38 = por %p36, %p37
      %p39 = scmp.ne.s32.totalorder %s31, %s34
      %p40 = scmp.eq.s32.totalorder %s21, 0
      %p41 = por %p39, %p40
      %p42 = scmp.ne.s32.totalorder %s31, %s34
      %p43 = scmp.eq.s32.totalorder %s26, 1
      %p44 = por %p42, %p43
      %p45 = scmp.ne.s32.totalorder %s34, %s35
      %p46 = scmp.eq.s32.totalorder %s26, 0
      %p47 = por %p45, %p46
      %p48 = scmp.ne.s32.totalorder %s34, %s35
      %p49 = scmp.eq.s32.totalorder %s27, 1
      %p50 = por %p48, %p49
      %p52 = scmp.ne.s32.totalorder %s35, %s51
      %p53 = scmp.eq.s32.totalorder %s27, 0
      %p54 = por %p52, %p53
      %s56 = sadd.s32 %s55, 1
      %p59 = scmp.eq.s32.totalorder %s21, 1
      %p60 = scmp.ne.s32.totalorder %s55, %s57
      %p61 = scmp.eq.s32.totalorder %s21, 0
      %p62 = por %p60, %p61
      %p63 = scmp.ne.s32.totalorder %s55, %s57
      %p64 = scmp.eq.s32.totalorder %s26, 1
      %p65 = por %p63, %p64
      %p66 = scmp.ne.s32.totalorder %s57, %s58
      %p67 = scmp.eq.s32.totalorder %s26, 0
      %p68 = por %p66, %p67
      %p69 = scmp.ne.s32.totalorder %s57, %s58
      %p70 = scmp.eq.s32.totalorder %s27, 1
      %p71 = por %p69, %p70
      %p73 = scmp.ne.s32.totalorder %s58, %s72
      %p74 = scmp.eq.s32.totalorder %s27, 0
      %p75 = por %p73, %p74
      %s77 = sadd.s32 %s76, 1
      %p80 = scmp.eq.s32.totalorder %s21, 1
      %p81 = scmp.ne.s32.totalorder %s76, %s78
      %p82 = scmp.eq.s32.totalorder %s21, 0
      %p83 = por %p81, %p82
      %p84 = scmp.ne.s32.totalorder %s76, %s78
      %p85 = scmp.eq.s32.totalorder %s26, 1
      %p86 = por %p84, %p85
      %p87 = scmp.ne.s32.totalorder %s78, %s79
      %p88 = scmp.eq.s32.totalorder %s26, 0
      %p89 = por %p87, %p88
      %p90 = scmp.ne.s32.totalorder %s78, %s79
      %p91 = scmp.eq.s32.totalorder %s27, 1
      %p92 = por %p90, %p91
      %p94 = scmp.ne.s32.totalorder %s79, %s93
      %p95 = scmp.eq.s32.totalorder %s27, 0
      %p96 = por %p94, %p95
      %s98 = sadd.s32 %s97, 1
      %p101 = scmp.eq.s32.totalorder %s21, 1
      %p102 = scmp.ne.s32.totalorder %s97, %s99
      %p103 = scmp.eq.s32.totalorder %s21, 0
      %p104 = por %p102, %p103
      %p105 = scmp.ne.s32.totalorder %s97, %s99
      %p106 = scmp.eq.s32.totalorder %s26, 1
      %p107 = por %p105, %p106
      %p108 = scmp.ne.s32.totalorder %s99, %s100
      %p109 = scmp.eq.s32.totalorder %s26, 0
      %p110 = por %p108, %p109
      %p111 = scmp.ne.s32.totalorder %s99, %s100
      %p112 = scmp.eq.s32.totalorder %s27, 1
      %p113 = por %p111, %p112
      %p115 = scmp.ne.s32.totalorder %s100, %s114
      %p116 = scmp.eq.s32.totalorder %s27, 0
      %p117 = por %p115, %p116
      %s119 = sadd.s32 %s118, 1
      %p122 = scmp.eq.s32.totalorder %s21, 1
      %p123 = scmp.ne.s32.totalorder %s118, %s120
      %p124 = scmp.eq.s32.totalorder %s21, 0
      %p125 = por %p123, %p124
      %p126 = scmp.ne.s32.totalorder %s118, %s120
      %p127 = scmp.eq.s32.totalorder %s26, 1
      %p128 = por %p126, %p127
      %p129 = scmp.ne.s32.totalorder %s120, %s121
      %p130 = scmp.eq.s32.totalorder %s26, 0
      %p131 = por %p129, %p130
      %p132 = scmp.ne.s32.totalorder %s120, %s121
      %p133 = scmp.eq.s32.totalorder %s27, 1
      %p134 = por %p132, %p133
      %p136 = scmp.ne.s32.totalorder %s121, %s135
      %p137 = scmp.eq.s32.totalorder %s27, 0
      %p138 = por %p136, %p137
      %s140 = sadd.s32 %s139, 1
      %p143 = scmp.eq.s32.totalorder %s21, 1
      %p144 = scmp.ne.s32.totalorder %s139, %s141
      %p145 = scmp.eq.s32.totalorder %s21, 0
      %p146 = por %p144, %p145
      %p147 = scmp.ne.s32.totalorder %s139, %s141
      %p148 = scmp.eq.s32.totalorder %s26, 1
      %p149 = por %p147, %p148
      %p150 = scmp.ne.s32.totalorder %s141, %s142
      %p151 = scmp.eq.s32.totalorder %s26, 0
      %p152 = por %p150, %p151
      %p153 = scmp.ne.s32.totalorder %s141, %s142
      %p154 = scmp.eq.s32.totalorder %s27, 1
      %p155 = por %p153, %p154
      %p157 = scmp.ne.s32.totalorder %s142, %s156
      %p158 = scmp.eq.s32.totalorder %s27, 0
      %p159 = por %p157, %p158
      %s161 = sadd.s32 %s160, 1
      %p164 = scmp.eq.s32.totalorder %s21, 1
      %p165 = scmp.ne.s32.totalorder %s160, %s162
      %p166 = scmp.eq.s32.totalorder %s21, 0
      %p167 = por %p165, %p166
      %p168 = scmp.ne.s32.totalorder %s160, %s162
      %p169 = scmp.eq.s32.totalorder %s26, 1
      %p170 = por %p168, %p169
      %p171 = scmp.ne.s32.totalorder %s162, %s163
      %p172 = scmp.eq.s32.totalorder %s26, 0
      %p173 = por %p171, %p172
      %p174 = scmp.ne.s32.totalorder %s162, %s163
      %p175 = scmp.eq.s32.totalorder %s27, 1
      %p176 = por %p174, %p175
      %p178 = scmp.ne.s32.totalorder %s163, %s177
      %p179 = scmp.eq.s32.totalorder %s27, 0
      %p180 = por %p178, %p179
      %s181 = ssub.s32 %s21, %s28
      %p182 = scmp.eq.s32.totalorder %s181, 0
      %s184 = sadd.s32 %s183, 1
      %s185 = scalar_select %p182, %s183, %s184
      %p188 = pneg %p182
      %p189 = scmp.eq.s32.totalorder %s21, 1
      %p190 = por %p188, %p189
      %p191 = scmp.ne.s32.totalorder %s183, %s186
      %p192 = scmp.eq.s32.totalorder %s21, 0
      %p193 = por %p191, %p192
      %p194 = scmp.ne.s32.totalorder %s183, %s186
      %p195 = scmp.eq.s32.totalorder %s26, 1
      %p196 = por %p194, %p195
      %p197 = scmp.ne.s32.totalorder %s186, %s187
      %p198 = scmp.eq.s32.totalorder %s26, 0
      %p199 = por %p197, %p198
      %p200 = scmp.ne.s32.totalorder %s186, %s187
      %p201 = scmp.eq.s32.totalorder %s27, 1
      %p202 = por %p200, %p201
      %p204 = scmp.ne.s32.totalorder %s187, %s203
      %p205 = scmp.eq.s32.totalorder %s27, 0
      %p206 = por %p204, %p205
      %p207 = scmp.le.s32.totalorder 1, %s21
      %p208 = scmp.lt.s32.totalorder %s21, 3
      %p209 = pnand %p207, %p208
      %p210 = pneg %p209
      // Predicated region
      $region9: #{tpu_custom_call.1} parent=5 // pred_check
        _
      $region10: #{tpu_custom_call.1} parent=5 // pred_check_branch
        %212 = sbr.rel (%p209) target = $region12
      $region11: #{tpu_custom_call.1} parent=5 // pred_region
        %s213 = ssub.s32 %s21, 1
        // Predicated region
        $region13: #{tpu_custom_call.1} parent=11 // pred_check
          %p214 = pneg %p68
        $region14: #{tpu_custom_call.1} parent=11 // pred_check_branch
          %216 = sbr.rel (%p214) target = $region16
        $region15: #{tpu_custom_call.1} parent=11 // pred_region
          %s218 = ssub.s32 1024, 1024
          %219 = vsyncadd [#allocation6], %s218
          %s220 = sshll.u32 [#allocation5], 4
          %s221 = int_to_ptr.vmem [resolvable:$true] %s220
          %226 = dma.hbm_to_vmem [thread:$0]  %s1, 1024, %s221, [#allocation6], 64, 64, 4
        $region16: #{tpu_custom_call.1} parent=11 // pred_fallthru
          _
        // Predicated region
        $region17: #{tpu_custom_call.1} parent=11 // pred_check
          %p227 = pneg %p89
        $region18: #{tpu_custom_call.1} parent=11 // pred_check_branch
          %229 = sbr.rel (%p227) target = $region20
        $region19: #{tpu_custom_call.1} parent=11 // pred_region
          _
        $region20: #{tpu_custom_call.1} parent=11 // pred_fallthru
          _
        // Predicated region
        $region21: #{tpu_custom_call.1} parent=11 // pred_check
          %p230 = pneg %p110
        $region22: #{tpu_custom_call.1} parent=11 // pred_check_branch
          %232 = sbr.rel (%p230) target = $region24
        $region23: #{tpu_custom_call.1} parent=11 // pred_region
          %s234 = ssub.s32 2048, 2048
          %235 = vsyncadd [#allocation6], %s234
          %s236 = sshll.u32 [#allocation7], 4
          %s237 = int_to_ptr.vmem [resolvable:$true] %s236
          %242 = dma.hbm_to_vmem [thread:$0]  %s3, 2048, %s237, [#allocation6], 128, 128, 8
        $region24: #{tpu_custom_call.1} parent=11 // pred_fallthru
          _
        // Predicated region
        $region25: #{tpu_custom_call.1} parent=11 // pred_check
          %p243 = pneg %p131
        $region26: #{tpu_custom_call.1} parent=11 // pred_check_branch
          %245 = sbr.rel (%p243) target = $region28
        $region27: #{tpu_custom_call.1} parent=11 // pred_region
          _
        $region28: #{tpu_custom_call.1} parent=11 // pred_fallthru
          _
        // Predicated region
        $region29: #{tpu_custom_call.1} parent=11 // pred_check
          %p246 = pneg %p152
        $region30: #{tpu_custom_call.1} parent=11 // pred_check_branch
          %248 = sbr.rel (%p246) target = $region32
        $region31: #{tpu_custom_call.1} parent=11 // pred_region
          %s250 = ssub.s32 2048, 2048
          %251 = vsyncadd [#allocation9], %s250
          %s252 = sshll.u32 [#allocation8], 4
          %s253 = int_to_ptr.vmem [resolvable:$true] %s252
          %258 = dma.hbm_to_vmem [thread:$0]  %s5, 2048, %s253, [#allocation9], 64, 64, 4
        $region32: #{tpu_custom_call.1} parent=11 // pred_fallthru
          _
        // Predicated region
        $region33: #{tpu_custom_call.1} parent=11 // pred_check
          %p259 = pneg %p173
        $region34: #{tpu_custom_call.1} parent=11 // pred_check_branch
          %261 = sbr.rel (%p259) target = $region36
        $region35: #{tpu_custom_call.1} parent=11 // pred_region
          _
        $region36: #{tpu_custom_call.1} parent=11 // pred_fallthru
          _
      $region12: #{tpu_custom_call.1} parent=5 // pred_fallthru
        _
      %p262 = scmp.lt.s32.totalorder %s21, 2
      // Predicated region
      $region37: #{tpu_custom_call.1} parent=5 // pred_check
        %p263 = pneg %p262
      $region38: #{tpu_custom_call.1} parent=5 // pred_check_branch
        %265 = sbr.rel (%p263) target = $region40
      $region39: #{tpu_custom_call.1} parent=5 // pred_region
        // Predicated region
        $region41: #{tpu_custom_call.1} parent=39 // pred_check
          %p266 = pneg %p41
        $region42: #{tpu_custom_call.1} parent=39 // pred_check_branch
          %268 = sbr.rel (%p266) target = $region44
        $region43: #{tpu_custom_call.1} parent=39 // pred_region
          %s269 = sand.u32 %s31, 1
          %s270 = scalar_lea.sflag [#allocation3], %s269
          %s271 = sand.u32 %s31, 1
          %s272 = smul.addr %s271, 128
          %s273 = scalar_lea.vmem [#allocation2], %s272
          %s274 = smul.u32 16, %s21
          %s276 = ssub.s32 2048, 2048
          %277 = vsyncadd %s270, %s276
          %s278 = smul.addr %s274, 128
          %s279 = scalar_lea.hbm %s0, %s278
          %s280 = sshll.u32 %s273, 4
          %s281 = int_to_ptr.vmem [resolvable:$true] %s280
          %286 = dma.hbm_to_vmem [thread:$0]  %s279, 2048, %s281, %s270, 128, 128, 8
        $region44: #{tpu_custom_call.1} parent=39 // pred_fallthru
          _
      $region40: #{tpu_custom_call.1} parent=5 // pred_fallthru
        _
      %p287 = scmp.le.s32.totalorder 1, %s21
      %p288 = scmp.lt.s32.totalorder %s21, 3
      %p289 = pnand %p287, %p288
      %p290 = pneg %p289
      // Predicated region
      $region45: #{tpu_custom_call.1} parent=5 // pred_check
        _
      $region46: #{tpu_custom_call.1} parent=5 // pred_check_branch
        %292 = sbr.rel (%p289) target = $region48
      $region47: #{tpu_custom_call.1} parent=5 // pred_region
        %s293 = ssub.s32 %s21, 1
        %s294 = sand.u32 %s34, 1
        %s295 = scalar_lea.sflag [#allocation3], %s294
        %s296 = sand.u32 %s34, 1
        %s297 = smul.addr %s296, 128
        %s298 = scalar_lea.vmem [#allocation2], %s297
        // Predicated region
        $region49: #{tpu_custom_call.1} parent=47 // pred_check
          %p299 = pneg %p47
        $region50: #{tpu_custom_call.1} parent=47 // pred_check_branch
          %301 = sbr.rel (%p299) target = $region52
        $region51: #{tpu_custom_call.1} parent=47 // pred_region
          %302 = dma.done %s295, 2048
        $region52: #{tpu_custom_call.1} parent=47 // pred_fallthru
          _
        // Predicated region
        $region53: #{tpu_custom_call.1} parent=47 // pred_check
          %p303 = pneg %p68
        $region54: #{tpu_custom_call.1} parent=47 // pred_check_branch
          %305 = sbr.rel (%p303) target = $region56
        $region55: #{tpu_custom_call.1} parent=47 // pred_region
          %306 = dma.done [#allocation6], 1024
        $region56: #{tpu_custom_call.1} parent=47 // pred_fallthru
          _
        // Predicated region
        $region57: #{tpu_custom_call.1} parent=47 // pred_check
          %p307 = pneg %p110
        $region58: #{tpu_custom_call.1} parent=47 // pred_check_branch
          %309 = sbr.rel (%p307) target = $region60
        $region59: #{tpu_custom_call.1} parent=47 // pred_region
          %310 = dma.done [#allocation6], 2048
        $region60: #{tpu_custom_call.1} parent=47 // pred_fallthru
          _
        // Predicated region
        $region61: #{tpu_custom_call.1} parent=47 // pred_check
          %p311 = pneg %p152
        $region62: #{tpu_custom_call.1} parent=47 // pred_check_branch
          %313 = sbr.rel (%p311) target = $region64
        $region63: #{tpu_custom_call.1} parent=47 // pred_region
          %314 = dma.done [#allocation9], 2048
        $region64: #{tpu_custom_call.1} parent=47 // pred_fallthru
          _
        %s315 = sand.u32 %s34, 1
        %s316 = scalar_lea.sflag [#allocation3], %s315
        %s317 = sand.u32 %s34, 1
        %s318 = smul.addr %s317, 128
        %s319 = scalar_lea.vmem [#allocation2], %s318
        %p320 = pneg %p47
        %p321 = pneg %p44
        %p322 = pneg %p68
        %p323 = pneg %p65
        %p324 = pneg %p89
        %p325 = pneg %p86
        %p326 = pneg %p110
        %p327 = pneg %p107
        %p328 = pneg %p131
        %p329 = pneg %p128
        %p330 = pneg %p152
        %p331 = pneg %p149
        %p332 = pneg %p173
        %p333 = pneg %p170
        %p334 = pneg %p199
        %p335 = pneg %p196
        %s336 = sand.u32 %s186, 1
        %s337 = scalar_lea.sflag [#allocation4], %s336
        %s338 = sand.u32 %s186, 1
        %s339 = smul.addr %s338, 64
        %s340 = scalar_lea.vmem [#allocation10], %s339
        %s341 = smul.u32 16, %s26
        %s342 = smul.u32 16, %s26
        %v344 = vld [vmem:[%s298] sm:$0xff]
        %v345 = vld [vmem:[%s298 + $0x8] sm:$0xff]
        %v346 = vld [vmem:[%s298 + $0x10] sm:$0xff]
        %v347 = vld [vmem:[%s298 + $0x18] sm:$0xff]
        %v348 = vld [vmem:[%s298 + $0x20] sm:$0xff]
        %v349 = vld [vmem:[%s298 + $0x28] sm:$0xff]
        %v350 = vld [vmem:[%s298 + $0x30] sm:$0xff]
        %v351 = vld [vmem:[%s298 + $0x38] sm:$0xff]
        %v352 = vld [vmem:[%s298 + $0x40] sm:$0xff]
        %v353 = vld [vmem:[%s298 + $0x48] sm:$0xff]
        %v354 = vld [vmem:[%s298 + $0x50] sm:$0xff]
        %v355 = vld [vmem:[%s298 + $0x58] sm:$0xff]
        %v356 = vld [vmem:[%s298 + $0x60] sm:$0xff]
        %v357 = vld [vmem:[%s298 + $0x68] sm:$0xff]
        %v358 = vld [vmem:[%s298 + $0x70] sm:$0xff]
        %v359 = vld [vmem:[%s298 + $0x78] sm:$0xff]
        %v360 = vpack.c.bf16 %v345, %v344
        %v361 = vpack.c.bf16 %v347, %v346
        %v362 = vpack.c.bf16 %v349, %v348
        %v363 = vpack.c.bf16 %v351, %v350
        %v364 = vpack.c.bf16 %v353, %v352
        %v365 = vpack.c.bf16 %v355, %v354
        %v366 = vpack.c.bf16 %v357, %v356
        %v367 = vpack.c.bf16 %v359, %v358
        %v368 = vld [vmem:[#allocation5] sm:$0xf]
        %v369 = vld [vmem:[#allocation5 + $0x4] sm:$0xf]
        %v370 = vld [vmem:[#allocation5 + $0x8] sm:$0xf]
        %v371 = vld [vmem:[#allocation5 + $0xc] sm:$0xf]
        %v372 = vld [vmem:[#allocation5 + $0x10] sm:$0xf]
        %v373 = vld [vmem:[#allocation5 + $0x14] sm:$0xf]
        %v374 = vld [vmem:[#allocation5 + $0x18] sm:$0xf]
        %v375 = vld [vmem:[#allocation5 + $0x1c] sm:$0xf]
        %v376 = vld [vmem:[#allocation5 + $0x20] sm:$0xf]
        %v377 = vld [vmem:[#allocation5 + $0x24] sm:$0xf]
        %v378 = vld [vmem:[#allocation5 + $0x28] sm:$0xf]
        %v379 = vld [vmem:[#allocation5 + $0x2c] sm:$0xf]
        %v380 = vld [vmem:[#allocation5 + $0x30] sm:$0xf]
        %v381 = vld [vmem:[#allocation5 + $0x34] sm:$0xf]
        %v382 = vld [vmem:[#allocation5 + $0x38] sm:$0xf]
        %v383 = vld [vmem:[#allocation5 + $0x3c] sm:$0xf]
        %v384 = vld [vmem:[%s2] sm:$0x1]
        %v386 = vlaneseq
        %v387 = vshrl.u32 %v386, 7
        %v388 = vsub.s32 0, %v387
        %v389 = vrot.slane %v384, %v388
        %v407 = vunpack.c.l.b16 %v368
        %v408 = vunpack.c.l.b16 %v369
        %v409 = vunpack.c.l.b16 %v370
        %v410 = vunpack.c.l.b16 %v371
        %v411 = vunpack.c.l.b16 %v372
        %v412 = vunpack.c.l.b16 %v373
        %v413 = vunpack.c.l.b16 %v374
        %v414 = vunpack.c.l.b16 %v375
        %v415 = vunpack.c.l.b16 %v376
        %v416 = vunpack.c.l.b16 %v377
        %v417 = vunpack.c.l.b16 %v378
        %v418 = vunpack.c.l.b16 %v379
        %v419 = vunpack.c.l.b16 %v380
        %v420 = vunpack.c.l.b16 %v381
        %v421 = vunpack.c.l.b16 %v382
        %v422 = vunpack.c.l.b16 %v383
        %v423 = vpack.c.b16 %v408, %v407
        %v424 = vpack.c.b16 %v410, %v409
        %v425 = vpack.c.b16 %v412, %v411
        %v426 = vpack.c.b16 %v414, %v413
        %v427 = vpack.c.b16 %v416, %v415
        %v428 = vpack.c.b16 %v418, %v417
        %v429 = vpack.c.b16 %v420, %v419
        %v430 = vpack.c.b16 %v422, %v421
        %439 = vmatprep.subr.bf16.mxu0 0
        %440 = vmatpush1.bf16.msra.mxu0 %v423
        %441 = vmatprep.subr.bf16.mxu0 0
        %442 = vmatpush1.bf16.msra.mxu0 %v424
        %443 = vmatprep.subr.bf16.mxu0 0
        %444 = vmatpush1.bf16.msra.mxu0 %v425
        %445 = vmatprep.subr.bf16.mxu0 0
        %446 = vmatpush1.bf16.msra.mxu0 %v426
        %447 = vmatprep.subr.bf16.mxu0 0
        %448 = vmatpush1.bf16.msra.mxu0 %v427
        %449 = vmatprep.subr.bf16.mxu0 0
        %450 = vmatpush1.bf16.msra.mxu0 %v428
        %451 = vmatprep.subr.bf16.mxu0 0
        %452 = vmatpush1.bf16.msra.mxu0 %v429
        %453 = vmatprep.subr.bf16.mxu0 0
        %454 = vmatpush1.bf16.msra.mxu0 %v430
        %455 = vmatprep.subr.bf16.mxu0 0
        %456 = vmatpush1.bf16.msra.mxu0 0
        %457 = vmatprep.subr.bf16.mxu0 0
        %458 = vmatpush1.bf16.msra.mxu0 0
        %459 = vmatprep.subr.bf16.mxu0 0
        %460 = vmatpush1.bf16.msra.mxu0 0
        %461 = vmatprep.subr.bf16.mxu0 0
        %462 = vmatpush1.bf16.msra.mxu0 0
        %463 = vmatprep.subr.bf16.mxu0 0
        %464 = vmatpush1.bf16.msra.mxu0 0
        %465 = vmatprep.subr.bf16.mxu0 0
        %466 = vmatpush1.bf16.msra.mxu0 0
        %467 = vmatprep.subr.bf16.mxu0 0
        %468 = vmatpush1.bf16.msra.mxu0 0
        %469 = vmatprep.subr.bf16.mxu0 0
        %470 = vmatpush1.bf16.msra.mxu0 0
        %471 = vmatprep.mubr.bf16.mxu0 0
        %472 = vmatmul.mubr.bf16.gmra.mrb[0].mxu0 %v360
        %v473 = vpop.f32.mrb[0].mxu0
        %v474 = vadd.f32 %v389, %v473
        %v475 = vpop.f32.mrb[0].mxu0
        %v476 = vpop.f32.mrb[0].mxu0
        %v477 = vadd.f32 %v389, %v476
        %v478 = vpop.f32.mrb[0].mxu0
        %479 = vmatprep.mubr.bf16.mxu0 0
        %480 = vmatmul.mubr.bf16.gmra.mrb[0].mxu0 %v361
        %v481 = vpop.f32.mrb[0].mxu0
        %v482 = vadd.f32 %v389, %v481
        %v483 = vpop.f32.mrb[0].mxu0
        %v484 = vpop.f32.mrb[0].mxu0
        %v485 = vadd.f32 %v389, %v484
        %v486 = vpop.f32.mrb[0].mxu0
        %487 = vmatprep.mubr.bf16.mxu0 0
        %488 = vmatmul.mubr.bf16.gmra.mrb[0].mxu0 %v362
        %v489 = vpop.f32.mrb[0].mxu0
        %v490 = vadd.f32 %v389, %v489
        %v491 = vpop.f32.mrb[0].mxu0
        %v492 = vpop.f32.mrb[0].mxu0
        %v493 = vadd.f32 %v389, %v492
        %v494 = vpop.f32.mrb[0].mxu0
        %495 = vmatprep.mubr.bf16.mxu0 0
        %496 = vmatmul.mubr.bf16.gmra.mrb[0].mxu0 %v363
        %v497 = vpop.f32.mrb[0].mxu0
        %v498 = vadd.f32 %v389, %v497
        %v499 = vpop.f32.mrb[0].mxu0
        %v500 = vpop.f32.mrb[0].mxu0
        %v501 = vadd.f32 %v389, %v500
        %v502 = vpop.f32.mrb[0].mxu0
        %503 = vmatprep.mubr.bf16.mxu0 0
        %504 = vmatmul.mubr.bf16.gmra.mrb[0].mxu0 %v364
        %v505 = vpop.f32.mrb[0].mxu0
        %v506 = vadd.f32 %v389, %v505
        %v507 = vpop.f32.mrb[0].mxu0
        %v508 = vpop.f32.mrb[0].mxu0
        %v509 = vadd.f32 %v389, %v508
        %v510 = vpop.f32.mrb[0].mxu0
        %511 = vmatprep.mubr.bf16.mxu0 0
        %512 = vmatmul.mubr.bf16.gmra.mrb[0].mxu0 %v365
        %v513 = vpop.f32.mrb[0].mxu0
        %v514 = vadd.f32 %v389, %v513
        %v515 = vpop.f32.mrb[0].mxu0
        %v516 = vpop.f32.mrb[0].mxu0
        %v517 = vadd.f32 %v389, %v516
        %v518 = vpop.f32.mrb[0].mxu0
        %519 = vmatprep.mubr.bf16.mxu0 0
        %520 = vmatmul.mubr.bf16.gmra.mrb[0].mxu0 %v366
        %v521 = vpop.f32.mrb[0].mxu0
        %v522 = vadd.f32 %v389, %v521
        %v523 = vpop.f32.mrb[0].mxu0
        %v524 = vpop.f32.mrb[0].mxu0
        %v525 = vadd.f32 %v389, %v524
        %v526 = vpop.f32.mrb[0].mxu0
        %527 = vmatprep.mubr.bf16.mxu0 0
        %528 = vmatmul.mubr.bf16.gmra.mrb[0].mxu0 %v367
        %v529 = vpop.f32.mrb[0].mxu0
        %v530 = vadd.f32 %v389, %v529
        %v531 = vpop.f32.mrb[0].mxu0
        %v532 = vpop.f32.mrb[0].mxu0
        %v533 = vadd.f32 %v389, %v532
        %v534 = vpop.f32.mrb[0].mxu0
        %535 = vdwg.mxu0
        %v536 = vmul.f32 %v474, %v474
        %v537 = vmul.f32 %v477, %v477
        %v538 = vmul.f32 %v482, %v482
        %v539 = vmul.f32 %v485, %v485
        %v540 = vmul.f32 %v490, %v490
        %v541 = vmul.f32 %v493, %v493
        %v542 = vmul.f32 %v498, %v498
        %v543 = vmul.f32 %v501, %v501
        %v544 = vmul.f32 %v506, %v506
        %v545 = vmul.f32 %v509, %v509
        %v546 = vmul.f32 %v514, %v514
        %v547 = vmul.f32 %v517, %v517
        %v548 = vmul.f32 %v522, %v522
        %v549 = vmul.f32 %v525, %v525
        %v550 = vmul.f32 %v530, %v530
        %v551 = vmul.f32 %v533, %v533
        %v552 = vmul.f32 %v474, %v536
        %v553 = vmul.f32 %v477, %v537
        %v554 = vmul.f32 %v482, %v538
        %v555 = vmul.f32 %v485, %v539
        %v556 = vmul.f32 %v490, %v540
        %v557 = vmul.f32 %v493, %v541
        %v558 = vmul.f32 %v498, %v542
        %v559 = vmul.f32 %v501, %v543
        %v560 = vmul.f32 %v506, %v544
        %v561 = vmul.f32 %v509, %v545
        %v562 = vmul.f32 %v514, %v546
        %v563 = vmul.f32 %v517, %v547
        %v564 = vmul.f32 %v522, %v548
        %v565 = vmul.f32 %v525, %v549
        %v566 = vmul.f32 %v530, %v550
        %v567 = vmul.f32 %v533, %v551
        %v568 = vmul.f32 %v552, 0.044715
        %v569 = vmul.f32 %v553, 0.044715
        %v570 = vmul.f32 %v554, 0.044715
        %v571 = vmul.f32 %v555, 0.044715
        %v572 = vmul.f32 %v556, 0.044715
        %v573 = vmul.f32 %v557, 0.044715
        %v574 = vmul.f32 %v558, 0.044715
        %v575 = vmul.f32 %v559, 0.044715
        %v576 = vmul.f32 %v560, 0.044715
        %v577 = vmul.f32 %v561, 0.044715
        %v578 = vmul.f32 %v562, 0.044715
        %v579 = vmul.f32 %v563, 0.044715
        %v580 = vmul.f32 %v564, 0.044715
        %v581 = vmul.f32 %v565, 0.044715
        %v582 = vmul.f32 %v566, 0.044715
        %v583 = vmul.f32 %v567, 0.044715
        %v584 = vadd.f32 %v474, %v568
        %v585 = vadd.f32 %v477, %v569
        %v586 = vadd.f32 %v482, %v570
        %v587 = vadd.f32 %v485, %v571
        %v588 = vadd.f32 %v490, %v572
        %v589 = vadd.f32 %v493, %v573
        %v590 = vadd.f32 %v498, %v574
        %v591 = vadd.f32 %v501, %v575
        %v592 = vadd.f32 %v506, %v576
        %v593 = vadd.f32 %v509, %v577
        %v594 = vadd.f32 %v514, %v578
        %v595 = vadd.f32 %v517, %v579
        %v596 = vadd.f32 %v522, %v580
        %v597 = vadd.f32 %v525, %v581
        %v598 = vadd.f32 %v530, %v582
        %v599 = vadd.f32 %v533, %v583
        %v600 = vmul.f32 %v584, 0.7978846
        %v601 = vmul.f32 %v585, 0.7978846
        %v602 = vmul.f32 %v586, 0.7978846
        %v603 = vmul.f32 %v587, 0.7978846
        %v604 = vmul.f32 %v588, 0.7978846
        %v605 = vmul.f32 %v589, 0.7978846
        %v606 = vmul.f32 %v590, 0.7978846
        %v607 = vmul.f32 %v591, 0.7978846
        %v608 = vmul.f32 %v592, 0.7978846
        %v609 = vmul.f32 %v593, 0.7978846
        %v610 = vmul.f32 %v594, 0.7978846
        %v611 = vmul.f32 %v595, 0.7978846
        %v612 = vmul.f32 %v596, 0.7978846
        %v613 = vmul.f32 %v597, 0.7978846
        %v614 = vmul.f32 %v598, 0.7978846
        %v615 = vmul.f32 %v599, 0.7978846
        %v616 = vtanh.pop %v600
        %v617 = vtanh.pop %v601
        %v618 = vtanh.pop %v602
        %v619 = vtanh.pop %v603
        %v620 = vtanh.pop %v604
        %v621 = vtanh.pop %v605
        %v622 = vtanh.pop %v606
        %v623 = vtanh.pop %v607
        %v624 = vtanh.pop %v608
        %v625 = vtanh.pop %v609
        %v626 = vtanh.pop %v610
        %v627 = vtanh.pop %v611
        %v628 = vtanh.pop %v612
        %v629 = vtanh.pop %v613
        %v630 = vtanh.pop %v614
        %v631 = vtanh.pop %v615
        %v632 = vadd.f32 %v616, 1.0
        %v633 = vadd.f32 %v617, 1.0
        %v634 = vadd.f32 %v618, 1.0
        %v635 = vadd.f32 %v619, 1.0
        %v636 = vadd.f32 %v620, 1.0
        %v637 = vadd.f32 %v621, 1.0
        %v638 = vadd.f32 %v622, 1.0
        %v639 = vadd.f32 %v623, 1.0
        %v640 = vadd.f32 %v624, 1.0
        %v641 = vadd.f32 %v625, 1.0
        %v642 = vadd.f32 %v626, 1.0
        %v643 = vadd.f32 %v627, 1.0
        %v644 = vadd.f32 %v628, 1.0
        %v645 = vadd.f32 %v629, 1.0
        %v646 = vadd.f32 %v630, 1.0
        %v647 = vadd.f32 %v631, 1.0
        %v648 = vmul.f32 %v632, 0.5
        %v649 = vmul.f32 %v633, 0.5
        %v650 = vmul.f32 %v634, 0.5
        %v651 = vmul.f32 %v635, 0.5
        %v652 = vmul.f32 %v636, 0.5
        %v653 = vmul.f32 %v637, 0.5
        %v654 = vmul.f32 %v638, 0.5
        %v655 = vmul.f32 %v639, 0.5
        %v656 = vmul.f32 %v640, 0.5
        %v657 = vmul.f32 %v641, 0.5
        %v658 = vmul.f32 %v642, 0.5
        %v659 = vmul.f32 %v643, 0.5
        %v660 = vmul.f32 %v644, 0.5
        %v661 = vmul.f32 %v645, 0.5
        %v662 = vmul.f32 %v646, 0.5
        %v663 = vmul.f32 %v647, 0.5
        %v664 = vmul.f32 %v474, %v648
        %v665 = vmul.f32 %v477, %v649
        %v666 = vmul.f32 %v482, %v650
        %v667 = vmul.f32 %v485, %v651
        %v668 = vmul.f32 %v490, %v652
        %v669 = vmul.f32 %v493, %v653
        %v670 = vmul.f32 %v498, %v654
        %v671 = vmul.f32 %v501, %v655
        %v672 = vmul.f32 %v506, %v656
        %v673 = vmul.f32 %v509, %v657
        %v674 = vmul.f32 %v514, %v658
        %v675 = vmul.f32 %v517, %v659
        %v676 = vmul.f32 %v522, %v660
        %v677 = vmul.f32 %v525, %v661
        %v678 = vmul.f32 %v530, %v662
        %v679 = vmul.f32 %v533, %v663
        %v680 = vpack.c.bf16 %v665, %v664
        %v681 = vpack.c.bf16 %v667, %v666
        %v682 = vpack.c.bf16 %v669, %v668
        %v683 = vpack.c.bf16 %v671, %v670
        %v684 = vpack.c.bf16 %v673, %v672
        %v685 = vpack.c.bf16 %v675, %v674
        %v686 = vpack.c.bf16 %v677, %v676
        %v687 = vpack.c.bf16 %v679, %v678
        %v688 = vld [vmem:[#allocation7] sm:$0xff]
        %v689 = vld [vmem:[#allocation7 + $0x8] sm:$0xff]
        %v690 = vld [vmem:[#allocation7 + $0x10] sm:$0xff]
        %v691 = vld [vmem:[#allocation7 + $0x18] sm:$0xff]
        %v692 = vld [vmem:[#allocation7 + $0x20] sm:$0xff]
        %v693 = vld [vmem:[#allocation7 + $0x28] sm:$0xff]
        %v694 = vld [vmem:[#allocation7 + $0x30] sm:$0xff]
        %v695 = vld [vmem:[#allocation7 + $0x38] sm:$0xff]
        %v696 = vld [vmem:[#allocation7 + $0x40] sm:$0xff]
        %v697 = vld [vmem:[#allocation7 + $0x48] sm:$0xff]
        %v698 = vld [vmem:[#allocation7 + $0x50] sm:$0xff]
        %v699 = vld [vmem:[#allocation7 + $0x58] sm:$0xff]
        %v700 = vld [vmem:[#allocation7 + $0x60] sm:$0xff]
        %v701 = vld [vmem:[#allocation7 + $0x68] sm:$0xff]
        %v702 = vld [vmem:[#allocation7 + $0x70] sm:$0xff]
        %v703 = vld [vmem:[#allocation7 + $0x78] sm:$0xff]
        %v704 = vld [vmem:[%s4] sm:$0x3]
        %v706 = vlaneseq
        %v707 = vshrl.u32 %v706, 7
        %v708 = vsub.s32 0, %v707
        %v709 = vrot.slane %v704, %v708
        %v710 = vlaneseq
        %v711 = vshrl.u32 %v710, 7
        %v712 = vsub.s32 1, %v711
        %v713 = vrot.slane %v704, %v712
        %v732 = vunpack.c.l.b16 %v688
        %v733 = vunpack.c.h.b16 %v688
        %v734 = vunpack.c.l.b16 %v689
        %v735 = vunpack.c.h.b16 %v689
        %v736 = vunpack.c.l.b16 %v690
        %v737 = vunpack.c.h.b16 %v690
        %v738 = vunpack.c.l.b16 %v691
        %v739 = vunpack.c.h.b16 %v691
        %v740 = vunpack.c.l.b16 %v692
        %v741 = vunpack.c.h.b16 %v692
        %v742 = vunpack.c.l.b16 %v693
        %v743 = vunpack.c.h.b16 %v693
        %v744 = vunpack.c.l.b16 %v694
        %v745 = vunpack.c.h.b16 %v694
        %v746 = vunpack.c.l.b16 %v695
        %v747 = vunpack.c.h.b16 %v695
        %v748 = vunpack.c.l.b16 %v696
        %v749 = vunpack.c.h.b16 %v696
        %v750 = vunpack.c.l.b16 %v697
        %v751 = vunpack.c.h.b16 %v697
        %v752 = vunpack.c.l.b16 %v698
        %v753 = vunpack.c.h.b16 %v698
        %v754 = vunpack.c.l.b16 %v699
        %v755 = vunpack.c.h.b16 %v699
        %v756 = vunpack.c.l.b16 %v700
        %v757 = vunpack.c.h.b16 %v700
        %v758 = vunpack.c.l.b16 %v701
        %v759 = vunpack.c.h.b16 %v701
        %v760 = vunpack.c.l.b16 %v702
        %v761 = vunpack.c.h.b16 %v702
        %v762 = vunpack.c.l.b16 %v703
        %v763 = vunpack.c.h.b16 %v703
        %v764 = vpack.c.b16 %v734, %v732
        %v765 = vpack.c.b16 %v735, %v733
        %v766 = vpack.c.b16 %v738, %v736
        %v767 = vpack.c.b16 %v739, %v737
        %v768 = vpack.c.b16 %v742, %v740
        %v769 = vpack.c.b16 %v743, %v741
        %v770 = vpack.c.b16 %v746, %v744
        %v771 = vpack.c.b16 %v747, %v745
        %v772 = vpack.c.b16 %v750, %v748
        %v773 = vpack.c.b16 %v751, %v749
        %v774 = vpack.c.b16 %v754, %v752
        %v775 = vpack.c.b16 %v755, %v753
        %v776 = vpack.c.b16 %v758, %v756
        %v777 = vpack.c.b16 %v759, %v757
        %v778 = vpack.c.b16 %v762, %v760
        %v779 = vpack.c.b16 %v763, %v761
        %796 = vmatprep.subr.bf16.mxu0 %v765
        %797 = vmatpush1.bf16.msra.mxu0 %v764
        %798 = vmatprep.subr.bf16.mxu0 %v767
        %799 = vmatpush1.bf16.msra.mxu0 %v766
        %800 = vmatprep.subr.bf16.mxu0 %v769
        %801 = vmatpush1.bf16.msra.mxu0 %v768
        %802 = vmatprep.subr.bf16.mxu0 %v771
        %803 = vmatpush1.bf16.msra.mxu0 %v770
        %804 = vmatprep.subr.bf16.mxu0 %v773
        %805 = vmatpush1.bf16.msra.mxu0 %v772
        %806 = vmatprep.subr.bf16.mxu0 %v775
        %807 = vmatpush1.bf16.msra.mxu0 %v774
        %808 = vmatprep.subr.bf16.mxu0 %v777
        %809 = vmatpush1.bf16.msra.mxu0 %v776
        %810 = vmatprep.subr.bf16.mxu0 %v779
        %811 = vmatpush1.bf16.msra.mxu0 %v778
        %812 = vmatprep.subr.bf16.mxu0 0
        %813 = vmatpush1.bf16.msra.mxu0 0
        %814 = vmatprep.subr.bf16.mxu0 0
        %815 = vmatpush1.bf16.msra.mxu0 0
        %816 = vmatprep.subr.bf16.mxu0 0
        %817 = vmatpush1.bf16.msra.mxu0 0
        %818 = vmatprep.subr.bf16.mxu0 0
        %819 = vmatpush1.bf16.msra.mxu0 0
        %820 = vmatprep.subr.bf16.mxu0 0
        %821 = vmatpush1.bf16.msra.mxu0 0
        %822 = vmatprep.subr.bf16.mxu0 0
        %823 = vmatpush1.bf16.msra.mxu0 0
        %824 = vmatprep.subr.bf16.mxu0 0
        %825 = vmatpush1.bf16.msra.mxu0 0
        %826 = vmatprep.subr.bf16.mxu0 0
        %827 = vmatpush1.bf16.msra.mxu0 0
        %828 = vmatprep.mubr.bf16.mxu0 0
        %829 = vmatmul.mubr.bf16.gmra.mrb[0].mxu0 %v680
        %v830 = vpop.f32.mrb[0].mxu0
        %v831 = vadd.f32 %v709, %v830
        %v832 = vpop.f32.mrb[0].mxu0
        %v833 = vadd.f32 %v713, %v832
        %v834 = vpop.f32.mrb[0].mxu0
        %v835 = vadd.f32 %v709, %v834
        %v836 = vpop.f32.mrb[0].mxu0
        %v837 = vadd.f32 %v713, %v836
        %838 = vmatprep.mubr.bf16.mxu0 0
        %839 = vmatmul.mubr.bf16.gmra.mrb[0].mxu0 %v681
        %v840 = vpop.f32.mrb[0].mxu0
        %v841 = vadd.f32 %v709, %v840
        %v842 = vpop.f32.mrb[0].mxu0
        %v843 = vadd.f32 %v713, %v842
        %v844 = vpop.f32.mrb[0].mxu0
        %v845 = vadd.f32 %v709, %v844
        %v846 = vpop.f32.mrb[0].mxu0
        %v847 = vadd.f32 %v713, %v846
        %848 = vmatprep.mubr.bf16.mxu0 0
        %849 = vmatmul.mubr.bf16.gmra.mrb[0].mxu0 %v682
        %v850 = vpop.f32.mrb[0].mxu0
        %v851 = vadd.f32 %v709, %v850
        %v852 = vpop.f32.mrb[0].mxu0
        %v853 = vadd.f32 %v713, %v852
        %v854 = vpop.f32.mrb[0].mxu0
        %v855 = vadd.f32 %v709, %v854
        %v856 = vpop.f32.mrb[0].mxu0
        %v857 = vadd.f32 %v713, %v856
        %858 = vmatprep.mubr.bf16.mxu0 0
        %859 = vmatmul.mubr.bf16.gmra.mrb[0].mxu0 %v683
        %v860 = vpop.f32.mrb[0].mxu0
        %v861 = vadd.f32 %v709, %v860
        %v862 = vpop.f32.mrb[0].mxu0
        %v863 = vadd.f32 %v713, %v862
        %v864 = vpop.f32.mrb[0].mxu0
        %v865 = vadd.f32 %v709, %v864
        %v866 = vpop.f32.mrb[0].mxu0
        %v867 = vadd.f32 %v713, %v866
        %868 = vmatprep.mubr.bf16.mxu0 0
        %869 = vmatmul.mubr.bf16.gmra.mrb[0].mxu0 %v684
        %v870 = vpop.f32.mrb[0].mxu0
        %v871 = vadd.f32 %v709, %v870
        %v872 = vpop.f32.mrb[0].mxu0
        %v873 = vadd.f32 %v713, %v872
        %v874 = vpop.f32.mrb[0].mxu0
        %v875 = vadd.f32 %v709, %v874
        %v876 = vpop.f32.mrb[0].mxu0
        %v877 = vadd.f32 %v713, %v876
        %878 = vmatprep.mubr.bf16.mxu0 0
        %879 = vmatmul.mubr.bf16.gmra.mrb[0].mxu0 %v685
        %v880 = vpop.f32.mrb[0].mxu0
        %v881 = vadd.f32 %v709, %v880
        %v882 = vpop.f32.mrb[0].mxu0
        %v883 = vadd.f32 %v713, %v882
        %v884 = vpop.f32.mrb[0].mxu0
        %v885 = vadd.f32 %v709, %v884
        %v886 = vpop.f32.mrb[0].mxu0
        %v887 = vadd.f32 %v713, %v886
        %888 = vmatprep.mubr.bf16.mxu0 0
        %889 = vmatmul.mubr.bf16.gmra.mrb[0].mxu0 %v686
        %v890 = vpop.f32.mrb[0].mxu0
        %v891 = vadd.f32 %v709, %v890
        %v892 = vpop.f32.mrb[0].mxu0
        %v893 = vadd.f32 %v713, %v892
        %v894 = vpop.f32.mrb[0].mxu0
        %v895 = vadd.f32 %v709, %v894
        %v896 = vpop.f32.mrb[0].mxu0
        %v897 = vadd.f32 %v713, %v896
        %898 = vmatprep.mubr.bf16.mxu0 0
        %899 = vmatmul.mubr.bf16.gmra.mrb[0].mxu0 %v687
        %v900 = vpop.f32.mrb[0].mxu0
        %v901 = vadd.f32 %v709, %v900
        %v902 = vpop.f32.mrb[0].mxu0
        %v903 = vadd.f32 %v713, %v902
        %v904 = vpop.f32.mrb[0].mxu0
        %v905 = vadd.f32 %v709, %v904
        %v906 = vpop.f32.mrb[0].mxu0
        %v907 = vadd.f32 %v713, %v906
        %908 = vdwg.mxu0
        %v909 = vmul.f32 %v831, %v831
        %v910 = vmul.f32 %v833, %v833
        %v911 = vmul.f32 %v835, %v835
        %v912 = vmul.f32 %v837, %v837
        %v913 = vmul.f32 %v841, %v841
        %v914 = vmul.f32 %v843, %v843
        %v915 = vmul.f32 %v845, %v845
        %v916 = vmul.f32 %v847, %v847
        %v917 = vmul.f32 %v851, %v851
        %v918 = vmul.f32 %v853, %v853
        %v919 = vmul.f32 %v855, %v855
        %v920 = vmul.f32 %v857, %v857
        %v921 = vmul.f32 %v861, %v861
        %v922 = vmul.f32 %v863, %v863
        %v923 = vmul.f32 %v865, %v865
        %v924 = vmul.f32 %v867, %v867
        %v925 = vmul.f32 %v871, %v871
        %v926 = vmul.f32 %v873, %v873
        %v927 = vmul.f32 %v875, %v875
        %v928 = vmul.f32 %v877, %v877
        %v929 = vmul.f32 %v881, %v881
        %v930 = vmul.f32 %v883, %v883
        %v931 = vmul.f32 %v885, %v885
        %v932 = vmul.f32 %v887, %v887
        %v933 = vmul.f32 %v891, %v891
        %v934 = vmul.f32 %v893, %v893
        %v935 = vmul.f32 %v895, %v895
        %v936 = vmul.f32 %v897, %v897
        %v937 = vmul.f32 %v901, %v901
        %v938 = vmul.f32 %v903, %v903
        %v939 = vmul.f32 %v905, %v905
        %v940 = vmul.f32 %v907, %v907
        %v941 = vmul.f32 %v831, %v909
        %v942 = vmul.f32 %v833, %v910
        %v943 = vmul.f32 %v835, %v911
        %v944 = vmul.f32 %v837, %v912
        %v945 = vmul.f32 %v841, %v913
        %v946 = vmul.f32 %v843, %v914
        %v947 = vmul.f32 %v845, %v915
        %v948 = vmul.f32 %v847, %v916
        %v949 = vmul.f32 %v851, %v917
        %v950 = vmul.f32 %v853, %v918
        %v951 = vmul.f32 %v855, %v919
        %v952 = vmul.f32 %v857, %v920
        %v953 = vmul.f32 %v861, %v921
        %v954 = vmul.f32 %v863, %v922
        %v955 = vmul.f32 %v865, %v923
        %v956 = vmul.f32 %v867, %v924
        %v957 = vmul.f32 %v871, %v925
        %v958 = vmul.f32 %v873, %v926
        %v959 = vmul.f32 %v875, %v927
        %v960 = vmul.f32 %v877, %v928
        %v961 = vmul.f32 %v881, %v929
        %v962 = vmul.f32 %v883, %v930
        %v963 = vmul.f32 %v885, %v931
        %v964 = vmul.f32 %v887, %v932
        %v965 = vmul.f32 %v891, %v933
        %v966 = vmul.f32 %v893, %v934
        %v967 = vmul.f32 %v895, %v935
        %v968 = vmul.f32 %v897, %v936
        %v969 = vmul.f32 %v901, %v937
        %v970 = vmul.f32 %v903, %v938
        %v971 = vmul.f32 %v905, %v939
        %v972 = vmul.f32 %v907, %v940
        %v973 = vmul.f32 %v941, 0.044715
        %v974 = vmul.f32 %v942, 0.044715
        %v975 = vmul.f32 %v943, 0.044715
        %v976 = vmul.f32 %v944, 0.044715
        %v977 = vmul.f32 %v945, 0.044715
        %v978 = vmul.f32 %v946, 0.044715
        %v979 = vmul.f32 %v947, 0.044715
        %v980 = vmul.f32 %v948, 0.044715
        %v981 = vmul.f32 %v949, 0.044715
        %v982 = vmul.f32 %v950, 0.044715
        %v983 = vmul.f32 %v951, 0.044715
        %v984 = vmul.f32 %v952, 0.044715
        %v985 = vmul.f32 %v953, 0.044715
        %v986 = vmul.f32 %v954, 0.044715
        %v987 = vmul.f32 %v955, 0.044715
        %v988 = vmul.f32 %v956, 0.044715
        %v989 = vmul.f32 %v957, 0.044715
        %v990 = vmul.f32 %v958, 0.044715
        %v991 = vmul.f32 %v959, 0.044715
        %v992 = vmul.f32 %v960, 0.044715
        %v993 = vmul.f32 %v961, 0.044715
        %v994 = vmul.f32 %v962, 0.044715
        %v995 = vmul.f32 %v963, 0.044715
        %v996 = vmul.f32 %v964, 0.044715
        %v997 = vmul.f32 %v965, 0.044715
        %v998 = vmul.f32 %v966, 0.044715
        %v999 = vmul.f32 %v967, 0.044715
        %v1000 = vmul.f32 %v968, 0.044715
        %v1001 = vmul.f32 %v969, 0.044715
        %v1002 = vmul.f32 %v970, 0.044715
        %v1003 = vmul.f32 %v971, 0.044715
        %v1004 = vmul.f32 %v972, 0.044715
        %v1005 = vadd.f32 %v831, %v973
        %v1006 = vadd.f32 %v833, %v974
        %v1007 = vadd.f32 %v835, %v975
        %v1008 = vadd.f32 %v837, %v976
        %v1009 = vadd.f32 %v841, %v977
        %v1010 = vadd.f32 %v843, %v978
        %v1011 = vadd.f32 %v845, %v979
        %v1012 = vadd.f32 %v847, %v980
        %v1013 = vadd.f32 %v851, %v981
        %v1014 = vadd.f32 %v853, %v982
        %v1015 = vadd.f32 %v855, %v983
        %v1016 = vadd.f32 %v857, %v984
        %v1017 = vadd.f32 %v861, %v985
        %v1018 = vadd.f32 %v863, %v986
        %v1019 = vadd.f32 %v865, %v987
        %v1020 = vadd.f32 %v867, %v988
        %v1021 = vadd.f32 %v871, %v989
        %v1022 = vadd.f32 %v873, %v990
        %v1023 = vadd.f32 %v875, %v991
        %v1024 = vadd.f32 %v877, %v992
        %v1025 = vadd.f32 %v881, %v993
        %v1026 = vadd.f32 %v883, %v994
        %v1027 = vadd.f32 %v885, %v995
        %v1028 = vadd.f32 %v887, %v996
        %v1029 = vadd.f32 %v891, %v997
        %v1030 = vadd.f32 %v893, %v998
        %v1031 = vadd.f32 %v895, %v999
        %v1032 = vadd.f32 %v897, %v1000
        %v1033 = vadd.f32 %v901, %v1001
        %v1034 = vadd.f32 %v903, %v1002
        %v1035 = vadd.f32 %v905, %v1003
        %v1036 = vadd.f32 %v907, %v1004
        %v1037 = vmul.f32 %v1005, 0.7978846
        %v1038 = vmul.f32 %v1006, 0.7978846
        %v1039 = vmul.f32 %v1007, 0.7978846
        %v1040 = vmul.f32 %v1008, 0.7978846
        %v1041 = vmul.f32 %v1009, 0.7978846
        %v1042 = vmul.f32 %v1010, 0.7978846
        %v1043 = vmul.f32 %v1011, 0.7978846
        %v1044 = vmul.f32 %v1012, 0.7978846
        %v1045 = vmul.f32 %v1013, 0.7978846
        %v1046 = vmul.f32 %v1014, 0.7978846
        %v1047 = vmul.f32 %v1015, 0.7978846
        %v1048 = vmul.f32 %v1016, 0.7978846
        %v1049 = vmul.f32 %v1017, 0.7978846
        %v1050 = vmul.f32 %v1018, 0.7978846
        %v1051 = vmul.f32 %v1019, 0.7978846
        %v1052 = vmul.f32 %v1020, 0.7978846
        %v1053 = vmul.f32 %v1021, 0.7978846
        %v1054 = vmul.f32 %v1022, 0.7978846
        %v1055 = vmul.f32 %v1023, 0.7978846
        %v1056 = vmul.f32 %v1024, 0.7978846
        %v1057 = vmul.f32 %v1025, 0.7978846
        %v1058 = vmul.f32 %v1026, 0.7978846
        %v1059 = vmul.f32 %v1027, 0.7978846
        %v1060 = vmul.f32 %v1028, 0.7978846
        %v1061 = vmul.f32 %v1029, 0.7978846
        %v1062 = vmul.f32 %v1030, 0.7978846
        %v1063 = vmul.f32 %v1031, 0.7978846
        %v1064 = vmul.f32 %v1032, 0.7978846
        %v1065 = vmul.f32 %v1033, 0.7978846
        %v1066 = vmul.f32 %v1034, 0.7978846
        %v1067 = vmul.f32 %v1035, 0.7978846
        %v1068 = vmul.f32 %v1036, 0.7978846
        %v1069 = vtanh.pop %v1037
        %v1070 = vtanh.pop %v1038
        %v1071 = vtanh.pop %v1039
        %v1072 = vtanh.pop %v1040
        %v1073 = vtanh.pop %v1041
        %v1074 = vtanh.pop %v1042
        %v1075 = vtanh.pop %v1043
        %v1076 = vtanh.pop %v1044
        %v1077 = vtanh.pop %v1045
        %v1078 = vtanh.pop %v1046
        %v1079 = vtanh.pop %v1047
        %v1080 = vtanh.pop %v1048
        %v1081 = vtanh.pop %v1049
        %v1082 = vtanh.pop %v1050
        %v1083 = vtanh.pop %v1051
        %v1084 = vtanh.pop %v1052
        %v1085 = vtanh.pop %v1053
        %v1086 = vtanh.pop %v1054
        %v1087 = vtanh.pop %v1055
        %v1088 = vtanh.pop %v1056
        %v1089 = vtanh.pop %v1057
        %v1090 = vtanh.pop %v1058
        %v1091 = vtanh.pop %v1059
        %v1092 = vtanh.pop %v1060
        %v1093 = vtanh.pop %v1061
        %v1094 = vtanh.pop %v1062
        %v1095 = vtanh.pop %v1063
        %v1096 = vtanh.pop %v1064
        %v1097 = vtanh.pop %v1065
        %v1098 = vtanh.pop %v1066
        %v1099 = vtanh.pop %v1067
        %v1100 = vtanh.pop %v1068
        %v1101 = vadd.f32 %v1069, 1.0
        %v1102 = vadd.f32 %v1070, 1.0
        %v1103 = vadd.f32 %v1071, 1.0
        %v1104 = vadd.f32 %v1072, 1.0
        %v1105 = vadd.f32 %v1073, 1.0
        %v1106 = vadd.f32 %v1074, 1.0
        %v1107 = vadd.f32 %v1075, 1.0
        %v1108 = vadd.f32 %v1076, 1.0
        %v1109 = vadd.f32 %v1077, 1.0
        %v1110 = vadd.f32 %v1078, 1.0
        %v1111 = vadd.f32 %v1079, 1.0
        %v1112 = vadd.f32 %v1080, 1.0
        %v1113 = vadd.f32 %v1081, 1.0
        %v1114 = vadd.f32 %v1082, 1.0
        %v1115 = vadd.f32 %v1083, 1.0
        %v1116 = vadd.f32 %v1084, 1.0
        %v1117 = vadd.f32 %v1085, 1.0
        %v1118 = vadd.f32 %v1086, 1.0
        %v1119 = vadd.f32 %v1087, 1.0
        %v1120 = vadd.f32 %v1088, 1.0
        %v1121 = vadd.f32 %v1089, 1.0
        %v1122 = vadd.f32 %v1090, 1.0
        %v1123 = vadd.f32 %v1091, 1.0
        %v1124 = vadd.f32 %v1092, 1.0
        %v1125 = vadd.f32 %v1093, 1.0
        %v1126 = vadd.f32 %v1094, 1.0
        %v1127 = vadd.f32 %v1095, 1.0
        %v1128 = vadd.f32 %v1096, 1.0
        %v1129 = vadd.f32 %v1097, 1.0
        %v1130 = vadd.f32 %v1098, 1.0
        %v1131 = vadd.f32 %v1099, 1.0
        %v1132 = vadd.f32 %v1100, 1.0
        %v1133 = vmul.f32 %v1101, 0.5
        %v1134 = vmul.f32 %v1102, 0.5
        %v1135 = vmul.f32 %v1103, 0.5
        %v1136 = vmul.f32 %v1104, 0.5
        %v1137 = vmul.f32 %v1105, 0.5
        %v1138 = vmul.f32 %v1106, 0.5
        %v1139 = vmul.f32 %v1107, 0.5
        %v1140 = vmul.f32 %v1108, 0.5
        %v1141 = vmul.f32 %v1109, 0.5
        %v1142 = vmul.f32 %v1110, 0.5
        %v1143 = vmul.f32 %v1111, 0.5
        %v1144 = vmul.f32 %v1112, 0.5
        %v1145 = vmul.f32 %v1113, 0.5
        %v1146 = vmul.f32 %v1114, 0.5
        %v1147 = vmul.f32 %v1115, 0.5
        %v1148 = vmul.f32 %v1116, 0.5
        %v1149 = vmul.f32 %v1117, 0.5
        %v1150 = vmul.f32 %v1118, 0.5
        %v1151 = vmul.f32 %v1119, 0.5
        %v1152 = vmul.f32 %v1120, 0.5
        %v1153 = vmul.f32 %v1121, 0.5
        %v1154 = vmul.f32 %v1122, 0.5
        %v1155 = vmul.f32 %v1123, 0.5
        %v1156 = vmul.f32 %v1124, 0.5
        %v1157 = vmul.f32 %v1125, 0.5
        %v1158 = vmul.f32 %v1126, 0.5
        %v1159 = vmul.f32 %v1127, 0.5
        %v1160 = vmul.f32 %v1128, 0.5
        %v1161 = vmul.f32 %v1129, 0.5
        %v1162 = vmul.f32 %v1130, 0.5
        %v1163 = vmul.f32 %v1131, 0.5
        %v1164 = vmul.f32 %v1132, 0.5
        %v1165 = vmul.f32 %v831, %v1133
        %v1166 = vmul.f32 %v833, %v1134
        %v1167 = vmul.f32 %v835, %v1135
        %v1168 = vmul.f32 %v837, %v1136
        %v1169 = vmul.f32 %v841, %v1137
        %v1170 = vmul.f32 %v843, %v1138
        %v1171 = vmul.f32 %v845, %v1139
        %v1172 = vmul.f32 %v847, %v1140
        %v1173 = vmul.f32 %v851, %v1141
        %v1174 = vmul.f32 %v853, %v1142
        %v1175 = vmul.f32 %v855, %v1143
        %v1176 = vmul.f32 %v857, %v1144
        %v1177 = vmul.f32 %v861, %v1145
        %v1178 = vmul.f32 %v863, %v1146
        %v1179 = vmul.f32 %v865, %v1147
        %v1180 = vmul.f32 %v867, %v1148
        %v1181 = vmul.f32 %v871, %v1149
        %v1182 = vmul.f32 %v873, %v1150
        %v1183 = vmul.f32 %v875, %v1151
        %v1184 = vmul.f32 %v877, %v1152
        %v1185 = vmul.f32 %v881, %v1153
        %v1186 = vmul.f32 %v883, %v1154
        %v1187 = vmul.f32 %v885, %v1155
        %v1188 = vmul.f32 %v887, %v1156
        %v1189 = vmul.f32 %v891, %v1157
        %v1190 = vmul.f32 %v893, %v1158
        %v1191 = vmul.f32 %v895, %v1159
        %v1192 = vmul.f32 %v897, %v1160
        %v1193 = vmul.f32 %v901, %v1161
        %v1194 = vmul.f32 %v903, %v1162
        %v1195 = vmul.f32 %v905, %v1163
        %v1196 = vmul.f32 %v907, %v1164
        %v1197 = vpack.c.bf16 %v1167, %v1165
        %v1198 = vpack.c.bf16 %v1168, %v1166
        %v1199 = vpack.c.bf16 %v1171, %v1169
        %v1200 = vpack.c.bf16 %v1172, %v1170
        %v1201 = vpack.c.bf16 %v1175, %v1173
        %v1202 = vpack.c.bf16 %v1176, %v1174
        %v1203 = vpack.c.bf16 %v1179, %v1177
        %v1204 = vpack.c.bf16 %v1180, %v1178
        %v1205 = vpack.c.bf16 %v1183, %v1181
        %v1206 = vpack.c.bf16 %v1184, %v1182
        %v1207 = vpack.c.bf16 %v1187, %v1185
        %v1208 = vpack.c.bf16 %v1188, %v1186
        %v1209 = vpack.c.bf16 %v1191, %v1189
        %v1210 = vpack.c.bf16 %v1192, %v1190
        %v1211 = vpack.c.bf16 %v1195, %v1193
        %v1212 = vpack.c.bf16 %v1196, %v1194
        %v1213 = vld [vmem:[#allocation8] sm:$0xf]
        %v1214 = vld [vmem:[#allocation8 + $0x4] sm:$0xf]
        %v1215 = vld [vmem:[#allocation8 + $0x8] sm:$0xf]
        %v1216 = vld [vmem:[#allocation8 + $0xc] sm:$0xf]
        %v1217 = vld [vmem:[#allocation8 + $0x10] sm:$0xf]
        %v1218 = vld [vmem:[#allocation8 + $0x14] sm:$0xf]
        %v1219 = vld [vmem:[#allocation8 + $0x18] sm:$0xf]
        %v1220 = vld [vmem:[#allocation8 + $0x1c] sm:$0xf]
        %v1221 = vld [vmem:[#allocation8 + $0x20] sm:$0xf]
        %v1222 = vld [vmem:[#allocation8 + $0x24] sm:$0xf]
        %v1223 = vld [vmem:[#allocation8 + $0x28] sm:$0xf]
        %v1224 = vld [vmem:[#allocation8 + $0x2c] sm:$0xf]
        %v1225 = vld [vmem:[#allocation8 + $0x30] sm:$0xf]
        %v1226 = vld [vmem:[#allocation8 + $0x34] sm:$0xf]
        %v1227 = vld [vmem:[#allocation8 + $0x38] sm:$0xf]
        %v1228 = vld [vmem:[#allocation8 + $0x3c] sm:$0xf]
        %v1229 = vld [vmem:[#allocation8 + $0x40] sm:$0xf]
        %v1230 = vld [vmem:[#allocation8 + $0x44] sm:$0xf]
        %v1231 = vld [vmem:[#allocation8 + $0x48] sm:$0xf]
        %v1232 = vld [vmem:[#allocation8 + $0x4c] sm:$0xf]
        %v1233 = vld [vmem:[#allocation8 + $0x50] sm:$0xf]
        %v1234 = vld [vmem:[#allocation8 + $0x54] sm:$0xf]
        %v1235 = vld [vmem:[#allocation8 + $0x58] sm:$0xf]
        %v1236 = vld [vmem:[#allocation8 + $0x5c] sm:$0xf]
        %v1237 = vld [vmem:[#allocation8 + $0x60] sm:$0xf]
        %v1238 = vld [vmem:[#allocation8 + $0x64] sm:$0xf]
        %v1239 = vld [vmem:[#allocation8 + $0x68] sm:$0xf]
        %v1240 = vld [vmem:[#allocation8 + $0x6c] sm:$0xf]
        %v1241 = vld [vmem:[#allocation8 + $0x70] sm:$0xf]
        %v1242 = vld [vmem:[#allocation8 + $0x74] sm:$0xf]
        %v1243 = vld [vmem:[#allocation8 + $0x78] sm:$0xf]
        %v1244 = vld [vmem:[#allocation8 + $0x7c] sm:$0xf]
        %v1245 = vld [vmem:[%s6] sm:$0x1]
        %v1247 = vlaneseq
        %v1248 = vshrl.u32 %v1247, 7
        %v1249 = vsub.s32 0, %v1248
        %v1250 = vrot.slane %v1245, %v1249
        %v1284 = vunpack.c.l.b16 %v1213
        %v1285 = vunpack.c.l.b16 %v1214
        %v1286 = vunpack.c.l.b16 %v1215
        %v1287 = vunpack.c.l.b16 %v1216
        %v1288 = vunpack.c.l.b16 %v1217
        %v1289 = vunpack.c.l.b16 %v1218
        %v1290 = vunpack.c.l.b16 %v1219
        %v1291 = vunpack.c.l.b16 %v1220
        %v1292 = vunpack.c.l.b16 %v1221
        %v1293 = vunpack.c.l.b16 %v1222
        %v1294 = vunpack.c.l.b16 %v1223
        %v1295 = vunpack.c.l.b16 %v1224
        %v1296 = vunpack.c.l.b16 %v1225
        %v1297 = vunpack.c.l.b16 %v1226
        %v1298 = vunpack.c.l.b16 %v1227
        %v1299 = vunpack.c.l.b16 %v1228
        %v1300 = vunpack.c.l.b16 %v1229
        %v1301 = vunpack.c.l.b16 %v1230
        %v1302 = vunpack.c.l.b16 %v1231
        %v1303 = vunpack.c.l.b16 %v1232
        %v1304 = vunpack.c.l.b16 %v1233
        %v1305 = vunpack.c.l.b16 %v1234
        %v1306 = vunpack.c.l.b16 %v1235
        %v1307 = vunpack.c.l.b16 %v1236
        %v1308 = vunpack.c.l.b16 %v1237
        %v1309 = vunpack.c.l.b16 %v1238
        %v1310 = vunpack.c.l.b16 %v1239
        %v1311 = vunpack.c.l.b16 %v1240
        %v1312 = vunpack.c.l.b16 %v1241
        %v1313 = vunpack.c.l.b16 %v1242
        %v1314 = vunpack.c.l.b16 %v1243
        %v1315 = vunpack.c.l.b16 %v1244
        %v1316 = vpack.c.b16 %v1285, %v1284
        %v1317 = vpack.c.b16 %v1287, %v1286
        %v1318 = vpack.c.b16 %v1289, %v1288
        %v1319 = vpack.c.b16 %v1291, %v1290
        %v1320 = vpack.c.b16 %v1293, %v1292
        %v1321 = vpack.c.b16 %v1295, %v1294
        %v1322 = vpack.c.b16 %v1297, %v1296
        %v1323 = vpack.c.b16 %v1299, %v1298
        %v1324 = vpack.c.b16 %v1301, %v1300
        %v1325 = vpack.c.b16 %v1303, %v1302
        %v1326 = vpack.c.b16 %v1305, %v1304
        %v1327 = vpack.c.b16 %v1307, %v1306
        %v1328 = vpack.c.b16 %v1309, %v1308
        %v1329 = vpack.c.b16 %v1311, %v1310
        %v1330 = vpack.c.b16 %v1313, %v1312
        %v1331 = vpack.c.b16 %v1315, %v1314
        %1348 = vmatprep.subr.bf16.mxu0 0
        %1349 = vmatpush1.bf16.msra.mxu0 %v1316
        %1350 = vmatprep.subr.bf16.mxu0 0
        %1351 = vmatpush1.bf16.msra.mxu0 %v1317
        %1352 = vmatprep.subr.bf16.mxu0 0
        %1353 = vmatpush1.bf16.msra.mxu0 %v1318
        %1354 = vmatprep.subr.bf16.mxu0 0
        %1355 = vmatpush1.bf16.msra.mxu0 %v1319
        %1356 = vmatprep.subr.bf16.mxu0 0
        %1357 = vmatpush1.bf16.msra.mxu0 %v1320
        %1358 = vmatprep.subr.bf16.mxu0 0
        %1359 = vmatpush1.bf16.msra.mxu0 %v1321
        %1360 = vmatprep.subr.bf16.mxu0 0
        %1361 = vmatpush1.bf16.msra.mxu0 %v1322
        %1362 = vmatprep.subr.bf16.mxu0 0
        %1363 = vmatpush1.bf16.msra.mxu0 %v1323
        %1364 = vmatprep.subr.bf16.mxu0 0
        %1365 = vmatpush1.bf16.msra.mxu0 %v1324
        %1366 = vmatprep.subr.bf16.mxu0 0
        %1367 = vmatpush1.bf16.msra.mxu0 %v1325
        %1368 = vmatprep.subr.bf16.mxu0 0
        %1369 = vmatpush1.bf16.msra.mxu0 %v1326
        %1370 = vmatprep.subr.bf16.mxu0 0
        %1371 = vmatpush1.bf16.msra.mxu0 %v1327
        %1372 = vmatprep.subr.bf16.mxu0 0
        %1373 = vmatpush1.bf16.msra.mxu0 %v1328
        %1374 = vmatprep.subr.bf16.mxu0 0
        %1375 = vmatpush1.bf16.msra.mxu0 %v1329
        %1376 = vmatprep.subr.bf16.mxu0 0
        %1377 = vmatpush1.bf16.msra.mxu0 %v1330
        %1378 = vmatprep.subr.bf16.mxu0 0
        %1379 = vmatpush1.bf16.msra.mxu0 %v1331
        %1380 = vmatprep.mubr.bf16.mxu0 %v1198
        %1381 = vmatmul.mubr.bf16.gmra.mrb[0].mxu0 %v1197
        %v1382 = vpop.f32.mrb[0].mxu0
        %v1383 = vadd.f32 %v1250, %v1382
        %v1384 = vpop.f32.mrb[0].mxu0
        %v1385 = vpop.f32.mrb[0].mxu0
        %v1386 = vadd.f32 %v1250, %v1385
        %v1387 = vpop.f32.mrb[0].mxu0
        %1388 = vmatprep.mubr.bf16.mxu0 %v1200
        %1389 = vmatmul.mubr.bf16.gmra.mrb[0].mxu0 %v1199
        %v1390 = vpop.f32.mrb[0].mxu0
        %v1391 = vadd.f32 %v1250, %v1390
        %v1392 = vpop.f32.mrb[0].mxu0
        %v1393 = vpop.f32.mrb[0].mxu0
        %v1394 = vadd.f32 %v1250, %v1393
        %v1395 = vpop.f32.mrb[0].mxu0
        %1396 = vmatprep.mubr.bf16.mxu0 %v1202
        %1397 = vmatmul.mubr.bf16.gmra.mrb[0].mxu0 %v1201
        %v1398 = vpop.f32.mrb[0].mxu0
        %v1399 = vadd.f32 %v1250, %v1398
        %v1400 = vpop.f32.mrb[0].mxu0
        %v1401 = vpop.f32.mrb[0].mxu0
        %v1402 = vadd.f32 %v1250, %v1401
        %v1403 = vpop.f32.mrb[0].mxu0
        %1404 = vmatprep.mubr.bf16.mxu0 %v1204
        %1405 = vmatmul.mubr.bf16.gmra.mrb[0].mxu0 %v1203
        %v1406 = vpop.f32.mrb[0].mxu0
        %v1407 = vadd.f32 %v1250, %v1406
        %v1408 = vpop.f32.mrb[0].mxu0
        %v1409 = vpop.f32.mrb[0].mxu0
        %v1410 = vadd.f32 %v1250, %v1409
        %v1411 = vpop.f32.mrb[0].mxu0
        %1412 = vmatprep.mubr.bf16.mxu0 %v1206
        %1413 = vmatmul.mubr.bf16.gmra.mrb[0].mxu0 %v1205
        %v1414 = vpop.f32.mrb[0].mxu0
        %v1415 = vadd.f32 %v1250, %v1414
        %v1416 = vpop.f32.mrb[0].mxu0
        %v1417 = vpop.f32.mrb[0].mxu0
        %v1418 = vadd.f32 %v1250, %v1417
        %v1419 = vpop.f32.mrb[0].mxu0
        %1420 = vmatprep.mubr.bf16.mxu0 %v1208
        %1421 = vmatmul.mubr.bf16.gmra.mrb[0].mxu0 %v1207
        %v1422 = vpop.f32.mrb[0].mxu0
        %v1423 = vadd.f32 %v1250, %v1422
        %v1424 = vpop.f32.mrb[0].mxu0
        %v1425 = vpop.f32.mrb[0].mxu0
        %v1426 = vadd.f32 %v1250, %v1425
        %v1427 = vpop.f32.mrb[0].mxu0
        %1428 = vmatprep.mubr.bf16.mxu0 %v1210
        %1429 = vmatmul.mubr.bf16.gmra.mrb[0].mxu0 %v1209
        %v1430 = vpop.f32.mrb[0].mxu0
        %v1431 = vadd.f32 %v1250, %v1430
        %v1432 = vpop.f32.mrb[0].mxu0
        %v1433 = vpop.f32.mrb[0].mxu0
        %v1434 = vadd.f32 %v1250, %v1433
        %v1435 = vpop.f32.mrb[0].mxu0
        %1436 = vmatprep.mubr.bf16.mxu0 %v1212
        %1437 = vmatmul.mubr.bf16.gmra.mrb[0].mxu0 %v1211
        %v1438 = vpop.f32.mrb[0].mxu0
        %v1439 = vadd.f32 %v1250, %v1438
        %v1440 = vpop.f32.mrb[0].mxu0
        %v1441 = vpop.f32.mrb[0].mxu0
        %v1442 = vadd.f32 %v1250, %v1441
        %v1443 = vpop.f32.mrb[0].mxu0
        %1444 = vdwg.mxu0
        %v1445 = vmul.f32 %v1383, %v1383
        %v1446 = vmul.f32 %v1386, %v1386
        %v1447 = vmul.f32 %v1391, %v1391
        %v1448 = vmul.f32 %v1394, %v1394
        %v1449 = vmul.f32 %v1399, %v1399
        %v1450 = vmul.f32 %v1402, %v1402
        %v1451 = vmul.f32 %v1407, %v1407
        %v1452 = vmul.f32 %v1410, %v1410
        %v1453 = vmul.f32 %v1415, %v1415
        %v1454 = vmul.f32 %v1418, %v1418
        %v1455 = vmul.f32 %v1423, %v1423
        %v1456 = vmul.f32 %v1426, %v1426
        %v1457 = vmul.f32 %v1431, %v1431
        %v1458 = vmul.f32 %v1434, %v1434
        %v1459 = vmul.f32 %v1439, %v1439
        %v1460 = vmul.f32 %v1442, %v1442
        %v1461 = vmul.f32 %v1383, %v1445
        %v1462 = vmul.f32 %v1386, %v1446
        %v1463 = vmul.f32 %v1391, %v1447
        %v1464 = vmul.f32 %v1394, %v1448
        %v1465 = vmul.f32 %v1399, %v1449
        %v1466 = vmul.f32 %v1402, %v1450
        %v1467 = vmul.f32 %v1407, %v1451
        %v1468 = vmul.f32 %v1410, %v1452
        %v1469 = vmul.f32 %v1415, %v1453
        %v1470 = vmul.f32 %v1418, %v1454
        %v1471 = vmul.f32 %v1423, %v1455
        %v1472 = vmul.f32 %v1426, %v1456
        %v1473 = vmul.f32 %v1431, %v1457
        %v1474 = vmul.f32 %v1434, %v1458
        %v1475 = vmul.f32 %v1439, %v1459
        %v1476 = vmul.f32 %v1442, %v1460
        %v1477 = vmul.f32 %v1461, 0.044715
        %v1478 = vmul.f32 %v1462, 0.044715
        %v1479 = vmul.f32 %v1463, 0.044715
        %v1480 = vmul.f32 %v1464, 0.044715
        %v1481 = vmul.f32 %v1465, 0.044715
        %v1482 = vmul.f32 %v1466, 0.044715
        %v1483 = vmul.f32 %v1467, 0.044715
        %v1484 = vmul.f32 %v1468, 0.044715
        %v1485 = vmul.f32 %v1469, 0.044715
        %v1486 = vmul.f32 %v1470, 0.044715
        %v1487 = vmul.f32 %v1471, 0.044715
        %v1488 = vmul.f32 %v1472, 0.044715
        %v1489 = vmul.f32 %v1473, 0.044715
        %v1490 = vmul.f32 %v1474, 0.044715
        %v1491 = vmul.f32 %v1475, 0.044715
        %v1492 = vmul.f32 %v1476, 0.044715
        %v1493 = vadd.f32 %v1383, %v1477
        %v1494 = vadd.f32 %v1386, %v1478
        %v1495 = vadd.f32 %v1391, %v1479
        %v1496 = vadd.f32 %v1394, %v1480
        %v1497 = vadd.f32 %v1399, %v1481
        %v1498 = vadd.f32 %v1402, %v1482
        %v1499 = vadd.f32 %v1407, %v1483
        %v1500 = vadd.f32 %v1410, %v1484
        %v1501 = vadd.f32 %v1415, %v1485
        %v1502 = vadd.f32 %v1418, %v1486
        %v1503 = vadd.f32 %v1423, %v1487
        %v1504 = vadd.f32 %v1426, %v1488
        %v1505 = vadd.f32 %v1431, %v1489
        %v1506 = vadd.f32 %v1434, %v1490
        %v1507 = vadd.f32 %v1439, %v1491
        %v1508 = vadd.f32 %v1442, %v1492
        %v1509 = vmul.f32 %v1493, 0.7978846
        %v1510 = vmul.f32 %v1494, 0.7978846
        %v1511 = vmul.f32 %v1495, 0.7978846
        %v1512 = vmul.f32 %v1496, 0.7978846
        %v1513 = vmul.f32 %v1497, 0.7978846
        %v1514 = vmul.f32 %v1498, 0.7978846
        %v1515 = vmul.f32 %v1499, 0.7978846
        %v1516 = vmul.f32 %v1500, 0.7978846
        %v1517 = vmul.f32 %v1501, 0.7978846
        %v1518 = vmul.f32 %v1502, 0.7978846
        %v1519 = vmul.f32 %v1503, 0.7978846
        %v1520 = vmul.f32 %v1504, 0.7978846
        %v1521 = vmul.f32 %v1505, 0.7978846
        %v1522 = vmul.f32 %v1506, 0.7978846
        %v1523 = vmul.f32 %v1507, 0.7978846
        %v1524 = vmul.f32 %v1508, 0.7978846
        %v1525 = vtanh.pop %v1509
        %v1526 = vtanh.pop %v1510
        %v1527 = vtanh.pop %v1511
        %v1528 = vtanh.pop %v1512
        %v1529 = vtanh.pop %v1513
        %v1530 = vtanh.pop %v1514
        %v1531 = vtanh.pop %v1515
        %v1532 = vtanh.pop %v1516
        %v1533 = vtanh.pop %v1517
        %v1534 = vtanh.pop %v1518
        %v1535 = vtanh.pop %v1519
        %v1536 = vtanh.pop %v1520
        %v1537 = vtanh.pop %v1521
        %v1538 = vtanh.pop %v1522
        %v1539 = vtanh.pop %v1523
        %v1540 = vtanh.pop %v1524
        %v1541 = vadd.f32 %v1525, 1.0
        %v1542 = vadd.f32 %v1526, 1.0
        %v1543 = vadd.f32 %v1527, 1.0
        %v1544 = vadd.f32 %v1528, 1.0
        %v1545 = vadd.f32 %v1529, 1.0
        %v1546 = vadd.f32 %v1530, 1.0
        %v1547 = vadd.f32 %v1531, 1.0
        %v1548 = vadd.f32 %v1532, 1.0
        %v1549 = vadd.f32 %v1533, 1.0
        %v1550 = vadd.f32 %v1534, 1.0
        %v1551 = vadd.f32 %v1535, 1.0
        %v1552 = vadd.f32 %v1536, 1.0
        %v1553 = vadd.f32 %v1537, 1.0
        %v1554 = vadd.f32 %v1538, 1.0
        %v1555 = vadd.f32 %v1539, 1.0
        %v1556 = vadd.f32 %v1540, 1.0
        %v1557 = vmul.f32 %v1541, 0.5
        %v1558 = vmul.f32 %v1542, 0.5
        %v1559 = vmul.f32 %v1543, 0.5
        %v1560 = vmul.f32 %v1544, 0.5
        %v1561 = vmul.f32 %v1545, 0.5
        %v1562 = vmul.f32 %v1546, 0.5
        %v1563 = vmul.f32 %v1547, 0.5
        %v1564 = vmul.f32 %v1548, 0.5
        %v1565 = vmul.f32 %v1549, 0.5
        %v1566 = vmul.f32 %v1550, 0.5
        %v1567 = vmul.f32 %v1551, 0.5
        %v1568 = vmul.f32 %v1552, 0.5
        %v1569 = vmul.f32 %v1553, 0.5
        %v1570 = vmul.f32 %v1554, 0.5
        %v1571 = vmul.f32 %v1555, 0.5
        %v1572 = vmul.f32 %v1556, 0.5
        %v1573 = vmul.f32 %v1383, %v1557
        %v1574 = vmul.f32 %v1386, %v1558
        %v1575 = vmul.f32 %v1391, %v1559
        %v1576 = vmul.f32 %v1394, %v1560
        %v1577 = vmul.f32 %v1399, %v1561
        %v1578 = vmul.f32 %v1402, %v1562
        %v1579 = vmul.f32 %v1407, %v1563
        %v1580 = vmul.f32 %v1410, %v1564
        %v1581 = vmul.f32 %v1415, %v1565
        %v1582 = vmul.f32 %v1418, %v1566
        %v1583 = vmul.f32 %v1423, %v1567
        %v1584 = vmul.f32 %v1426, %v1568
        %v1585 = vmul.f32 %v1431, %v1569
        %v1586 = vmul.f32 %v1434, %v1570
        %v1587 = vmul.f32 %v1439, %v1571
        %v1588 = vmul.f32 %v1442, %v1572
        %v1589 = vpack.c.bf16 %v1574, %v1573
        %v1590 = vpack.c.bf16 %v1576, %v1575
        %v1591 = vpack.c.bf16 %v1578, %v1577
        %v1592 = vpack.c.bf16 %v1580, %v1579
        %v1593 = vpack.c.bf16 %v1582, %v1581
        %v1594 = vpack.c.bf16 %v1584, %v1583
        %v1595 = vpack.c.bf16 %v1586, %v1585
        %v1596 = vpack.c.bf16 %v1588, %v1587
        %v1605 = vunpack.c.l.b16 %v1589
        %v1606 = vunpack.c.h.b16 %v1589
        %v1607 = vunpack.c.l.b16 %v1590
        %v1608 = vunpack.c.h.b16 %v1590
        %v1609 = vunpack.c.l.b16 %v1591
        %v1610 = vunpack.c.h.b16 %v1591
        %v1611 = vunpack.c.l.b16 %v1592
        %v1612 = vunpack.c.h.b16 %v1592
        %v1613 = vunpack.c.l.b16 %v1593
        %v1614 = vunpack.c.h.b16 %v1593
        %v1615 = vunpack.c.l.b16 %v1594
        %v1616 = vunpack.c.h.b16 %v1594
        %v1617 = vunpack.c.l.b16 %v1595
        %v1618 = vunpack.c.h.b16 %v1595
        %v1619 = vunpack.c.l.b16 %v1596
        %v1620 = vunpack.c.h.b16 %v1596
        %v1621 = vpack.c.b16 %v1605, %v1605
        %v1622 = vpack.c.b16 %v1606, %v1606
        %v1623 = vpack.c.b16 %v1607, %v1607
        %v1624 = vpack.c.b16 %v1608, %v1608
        %v1625 = vpack.c.b16 %v1609, %v1609
        %v1626 = vpack.c.b16 %v1610, %v1610
        %v1627 = vpack.c.b16 %v1611, %v1611
        %v1628 = vpack.c.b16 %v1612, %v1612
        %v1629 = vpack.c.b16 %v1613, %v1613
        %v1630 = vpack.c.b16 %v1614, %v1614
        %v1631 = vpack.c.b16 %v1615, %v1615
        %v1632 = vpack.c.b16 %v1616, %v1616
        %v1633 = vpack.c.b16 %v1617, %v1617
        %v1634 = vpack.c.b16 %v1618, %v1618
        %v1635 = vpack.c.b16 %v1619, %v1619
        %v1636 = vpack.c.b16 %v1620, %v1620
        %1653 = vst [vmem:[%s340] sm:$0xf] %v1621
        %1654 = vst [vmem:[%s340 + $0x4] sm:$0xf] %v1622
        %1655 = vst [vmem:[%s340 + $0x8] sm:$0xf] %v1623
        %1656 = vst [vmem:[%s340 + $0xc] sm:$0xf] %v1624
        %1657 = vst [vmem:[%s340 + $0x10] sm:$0xf] %v1625
        %1658 = vst [vmem:[%s340 + $0x14] sm:$0xf] %v1626
        %1659 = vst [vmem:[%s340 + $0x18] sm:$0xf] %v1627
        %1660 = vst [vmem:[%s340 + $0x1c] sm:$0xf] %v1628
        %1661 = vst [vmem:[%s340 + $0x20] sm:$0xf] %v1629
        %1662 = vst [vmem:[%s340 + $0x24] sm:$0xf] %v1630
        %1663 = vst [vmem:[%s340 + $0x28] sm:$0xf] %v1631
        %1664 = vst [vmem:[%s340 + $0x2c] sm:$0xf] %v1632
        %1665 = vst [vmem:[%s340 + $0x30] sm:$0xf] %v1633
        %1666 = vst [vmem:[%s340 + $0x34] sm:$0xf] %v1634
        %1667 = vst [vmem:[%s340 + $0x38] sm:$0xf] %v1635
        %1668 = vst [vmem:[%s340 + $0x3c] sm:$0xf] %v1636
        %s1669 = sand.u32 %s186, 1
        %s1670 = scalar_lea.sflag [#allocation4], %s1669
        %s1671 = sand.u32 %s186, 1
        %s1672 = smul.addr %s1671, 64
        %s1673 = scalar_lea.vmem [#allocation10], %s1672
        // Predicated region
        $region65: #{tpu_custom_call.1} parent=47 // pred_check
          %p1674 = pneg %p196
        $region66: #{tpu_custom_call.1} parent=47 // pred_check_branch
          %1676 = sbr.rel (%p1674) target = $region68
        $region67: #{tpu_custom_call.1} parent=47 // pred_region
          %s1677 = smul.u32 16, %s26
          %s1679 = ssub.s32 1024, 1024
          %1680 = vsyncadd %s1670, %s1679
          %s1681 = smul.addr %s1677, 64
          %s1682 = scalar_lea.hbm %s7, %s1681
          %s1683 = sshll.u32 %s1673, 4
          %s1684 = int_to_ptr.vmem [resolvable:$true] %s1683
          %1689 = dma.vmem_to_hbm [thread:$0]  %s1684, 1024, %s1682, %s1670, 64, 64, 4
        $region68: #{tpu_custom_call.1} parent=47 // pred_fallthru
          _
      $region48: #{tpu_custom_call.1} parent=5 // pred_fallthru
        _
      %p1690 = scmp.le.s32.totalorder 2, %s21
      // Predicated region
      $region69: #{tpu_custom_call.1} parent=5 // pred_check
        %p1691 = pneg %p1690
      $region70: #{tpu_custom_call.1} parent=5 // pred_check_branch
        %1693 = sbr.rel (%p1691) target = $region72
      $region71: #{tpu_custom_call.1} parent=5 // pred_region
        %s1694 = ssub.s32 %s21, 2
        // Predicated region
        $region73: #{tpu_custom_call.1} parent=71 // pred_check
          %p1695 = pneg %p202
        $region74: #{tpu_custom_call.1} parent=71 // pred_check_branch
          %1697 = sbr.rel (%p1695) target = $region76
        $region75: #{tpu_custom_call.1} parent=71 // pred_region
          %s1698 = sand.u32 %s187, 1
          %s1699 = scalar_lea.sflag [#allocation4], %s1698
          %s1700 = sand.u32 %s187, 1
          %s1701 = smul.addr %s1700, 64
          %s1702 = scalar_lea.vmem [#allocation10], %s1701
          %1703 = dma.done %s1699, 1024
        $region76: #{tpu_custom_call.1} parent=71 // pred_fallthru
          _
      $region72: #{tpu_custom_call.1} parent=5 // pred_fallthru
        _
    $region6: #{tpu_custom_call.1} parent=1 // loop_footer
      %s25 = sadd.s32 1, %s21
    $region7: #{tpu_custom_call.1} parent=1 // loop_footer_branch
      %20 = sbr.rel target = $region3
    $region8: #{tpu_custom_call.1} parent=1 // loop_exit
      _
    %1704 = vsyncpa [#allocation3], 1
    %s1705 = scalar_lea.sflag [#allocation3], 1
    %1706 = vsyncpa %s1705, 1
    %1707 = vsyncpa [#allocation6], 1
    %1708 = vsyncpa [#allocation9], 1
    %1709 = vsyncpa [#allocation4], 1
    %s1710 = scalar_lea.sflag [#allocation4], 1
    %1711 = vsyncpa %s1710, 1

</llo_original>
